<compile_context>
chip_gen: v6e
topology: v6e:2x2x1
jax: 0.10.0
libtpu: 0.0.40
codegen_flags: <defaults>
</compile_context>

<pallas_src>
import functools

import jax
import jax.numpy as jnp
from jax import lax
from jax.experimental import pallas as pl
from jax.experimental.pallas import tpu as pltpu

VMEM = pltpu.MemorySpace.VMEM


def _vmem_limit_bytes():
    """Generation-aware scoped-VMEM budget: 3/4 of physical, safe fallback."""
    try:
        cap = pltpu.get_tpu_info().vmem_capacity_bytes
    except Exception:
        cap = 64 << 20          # v7x-sized conservative fallback
    return int(min(cap * 3 // 4, 112 << 20))


# ---------------- fused per-view encoder + predictor + CE loss -------------- #
def _fused_view_loss_kernel(xq_ref, xk_ref,
                            w_head_b_ref, b_head_b_ref, w_proj_b_ref, b_proj_b_ref,
                            w_head_m_ref, b_head_m_ref, w_proj_m_ref, b_proj_m_ref,
                            w1_ref, gamma_ref, beta_ref, w2_ref,
                            loss_ref, *, inv_t, two_t):
    # --- encoder trunk: global average pool over spatial, both paths --------
    # TODO(synk): at production encoder shapes (C=2048, HW=49) tile this over
    # (N, C) and route the spatial reduce through the MXU (x @ ones/HW).
    pooled_q = jnp.mean(xq_ref[...].astype(jnp.float32), axis=-1)[0]    # (N, C)
    pooled_k = jnp.mean(xk_ref[...].astype(jnp.float32), axis=-1)[0]    # (N, C)

    # --- base encoder head + projection on this step's q-view ---------------
    h = jnp.dot(pooled_q.astype(jnp.bfloat16), w_head_b_ref[...],
                preferred_element_type=jnp.float32)
    h = jnp.maximum(h + b_head_b_ref[...], 0.0)                         # (N, mlp)
    tmp = (jnp.dot(h.astype(jnp.bfloat16), w_proj_b_ref[...],
                   preferred_element_type=jnp.float32)
           + b_proj_b_ref[...])                                         # (N, dim)

    # --- predictor: Linear(no bias) -> BN1d (per-view batch stats, eps=1e-5)
    #     -> ReLU -> Linear(no bias) -------------------------------------------
    # TODO(synk): at production N, tile the batch axis and accumulate BN
    # sum/sumsq in VMEM scratch across N-tiles (two-phase normalize).
    p = jnp.dot(tmp.astype(jnp.bfloat16), w1_ref[...],
                preferred_element_type=jnp.float32)                     # (N, mlp)
    mean = jnp.mean(p, axis=0, keepdims=True)
    var = jnp.mean((p - mean) ** 2, axis=0, keepdims=True)
    p = (p - mean) * lax.rsqrt(var + 1e-5)
    p = jnp.maximum(p * gamma_ref[...] + beta_ref[...], 0.0)
    q = jnp.dot(p.astype(jnp.bfloat16), w2_ref[...],
                preferred_element_type=jnp.float32)                     # (N, dim)

    # --- momentum encoder on the OTHER view -> k (no grad path) --------------
    hm = jnp.dot(pooled_k.astype(jnp.bfloat16), w_head_m_ref[...],
                 preferred_element_type=jnp.float32)
    hm = jnp.maximum(hm + b_head_m_ref[...], 0.0)
    k = (jnp.dot(hm.astype(jnp.bfloat16), w_proj_m_ref[...],
                 preferred_element_type=jnp.float32)
         + b_proj_m_ref[...])                                           # (N, dim)

    # --- contrastive loss: CE(q_v, k_{1-v}) * 2T, labels = arange(N) ---------
    # F.normalize(x, dim=1): x / max(||x||, 1e-12) == x * rsqrt(max(sumsq,1e-24)).
    qn = q * lax.rsqrt(jnp.maximum(jnp.sum(q * q, axis=1, keepdims=True), 1e-24))
    kn = k * lax.rsqrt(jnp.maximum(jnp.sum(k * k, axis=1, keepdims=True), 1e-24))
    # logits in f32 for parity with torch; contract last dims (no kn.T copy).
    # TODO(synk): at production N (4096) tile k-blocks with an online LSE so the
    # (N, N) logits never materialize (fits v7x's 64 MiB VMEM).
    logits = lax.dot_general(qn, kn, (((1,), (1,)), ((), ())),
                             preferred_element_type=jnp.float32) * inv_t
    pos = jnp.sum(qn * kn, axis=1, keepdims=True) * inv_t     # positive pair (diag)
    row_max = jnp.max(logits, axis=1, keepdims=True)
    lse = jnp.log(jnp.sum(jnp.exp(logits - row_max), axis=1,
                          keepdims=True)) + row_max
    partial = jnp.mean(lse - pos) * two_t

    # Lane-dense scalar broadcast store (single unmasked vst per grid step).
    loss_ref[...] = jnp.broadcast_to(partial, loss_ref.shape)


def fused_views_and_loss(x_views, weights, *, T):
    """x_views: (2, N, C, HW) f32 -> scalar symmetric contrastive loss.

    grid=(2,) "parallel" over views: step v builds q_v (base+predictor,
    per-view BN) and k_{1-v} (momentum encoder) and its CE term entirely in
    VMEM.  Weight block indices are constant across the grid (single DMA)."""
    V, N, C, HW = x_views.shape
    assert V == 2

    def full_spec(a):
        return pl.BlockSpec(a.shape, lambda v, nd=a.ndim: (0,) * nd)

    in_specs = (
        [pl.BlockSpec((1, N, C, HW), lambda v: (v, 0, 0, 0)),        # q-view
         pl.BlockSpec((1, N, C, HW), lambda v: (1 - v, 0, 0, 0))]    # k-view
        + [full_spec(w) for w in weights]
    )
    partials = pl.pallas_call(
        functools.partial(_fused_view_loss_kernel,
                          inv_t=1.0 / float(T), two_t=2.0 * float(T)),
        out_shape=jax.ShapeDtypeStruct((2, 8, 128), jnp.float32),
        grid=(2,),
        in_specs=in_specs,
        out_specs=pl.BlockSpec((1, 8, 128), lambda v: (v, 0, 0)),
        compiler_params=pltpu.CompilerParams(
            dimension_semantics=("parallel",),
            vmem_limit_bytes=_vmem_limit_bytes()),
    )(x_views, x_views, *weights)
    return partials[0, 0, 0] + partials[1, 0, 0]


def _prep_weights(base, mom, pred):
    """Pre-cast matmul RHS operands to bf16 once (f32 accumulation in-kernel)."""
    bf = jnp.bfloat16
    return (base["w_head"].astype(bf), base["b_head"],
            base["w_proj"].astype(bf), base["b_proj"],
            mom["w_head"].astype(bf), mom["b_head"],
            mom["w_proj"].astype(bf), mom["b_proj"],
            pred["w1"].astype(bf), pred["gamma"], pred["beta"],
            pred["w2"].astype(bf))


# --------------------- momentum EMA (single fused launch) ------------------- #
def _momentum_kernel(*refs, m, n):
    base_refs, mom_refs, out_refs = refs[:n], refs[n:2 * n], refs[2 * n:]
    for br, mr, orf in zip(base_refs, mom_refs, out_refs):
        orf[...] = mr[...] * m + br[...] * (1.0 - m)


def momentum_update(base, momentum, m):
    """param_m = param_m * m + param_b * (1 - m); one launch, outputs alias the
    momentum inputs (truly in-place together with jit donation of `momentum`)."""
    # TODO(synk): at production param counts flatten params into one
    # (rows, 128) buffer and row-tile with a "parallel" grid (HBM-roofline EMA).
    names = sorted(base.keys())
    base_leaves = [base[k] for k in names]
    mom_leaves = [momentum[k] for k in names]
    n = len(names)
    vspec = pl.BlockSpec(memory_space=VMEM)
    outs = pl.pallas_call(
        functools.partial(_momentum_kernel, m=float(m), n=n),
        out_shape=tuple(jax.ShapeDtypeStruct(p.shape, p.dtype) for p in mom_leaves),
        in_specs=[vspec] * (2 * n),
        out_specs=tuple(vspec for _ in range(n)),
        input_output_aliases={n + i: i for i in range(n)},
        compiler_params=pltpu.CompilerParams(vmem_limit_bytes=_vmem_limit_bytes()),
    )(*base_leaves, *mom_leaves)
    return dict(zip(names, outs))


# ------------------------------- MoCo forward -------------------------------- #
@functools.partial(jax.jit, static_argnames=("m", "T"), donate_argnums=(1,))
def moco_forward(params, momentum, x1, x2, m, T=1.0):
    """Returns (loss, new_momentum). `momentum` is donated -> in-place EMA."""
    # momentum update happens before the k path (as in torch forward, no-grad).
    mom = momentum_update(params["base"], momentum, m)
    weights = _prep_weights(params["base"], mom, params["predictor"])

    N, C, H, W = x1.shape
    x_views = jnp.stack([x1, x2], axis=0).reshape(2, N, C, H * W)

    # TODO(synk): torch.distributed concat_all_gather omitted (single-device
    # world: gather == identity, rank = 0, labels = arange(N)).
    loss = fused_views_and_loss(x_views, weights, T=T)
    return loss, mom


# ------------------------------- param setup --------------------------------- #
def init_params(key, C, mlp_dim, dim):
    ks = jax.random.split(key, 4)
    base = {
        "w_head": jax.random.normal(ks[0], (C, mlp_dim), jnp.float32) * 0.05,
        "b_head": jnp.zeros((1, mlp_dim), jnp.float32),
        "w_proj": jax.random.normal(ks[1], (mlp_dim, dim), jnp.float32) * 0.05,
        "b_proj": jnp.zeros((1, dim), jnp.float32),
    }
    predictor = {
        "w1": jax.random.normal(ks[2], (dim, mlp_dim), jnp.float32) * 0.05,
        "gamma": jnp.ones((1, mlp_dim), jnp.float32),
        "beta": jnp.zeros((1, mlp_dim), jnp.float32),
        "w2": jax.random.normal(ks[3], (mlp_dim, dim), jnp.float32) * 0.05,
    }
    # momentum encoder starts as an exact (distinct-buffer) copy of the base
    # encoder so it can be donated independently at the jit boundary.
    momentum = jax.tree_util.tree_map(jnp.copy, base)
    # TODO(synk): BatchNorm1d running_mean/var not tracked (train-mode batch stats only).
    return {"base": base, "predictor": predictor}, momentum


if __name__ == "__main__":
    # Small but lane/sublane-friendly shapes: HW=256, mlp_dim=256, dim=128, N=8.
    N, C, H, W = 8, 8, 16, 16
    mlp_dim, dim = 256, 128
    T, m = 1.0, 0.99

    key = jax.random.PRNGKey(0)
    kx1, kx2, kp = jax.random.split(key, 3)
    x1 = jax.random.normal(kx1, (N, C, H, W), jnp.float32)
    x2 = jax.random.normal(kx2, (N, C, H, W), jnp.float32)
    params, momentum = init_params(kp, C, mlp_dim, dim)

    loss, momentum = moco_forward(params, momentum, x1, x2, m=m, T=T)
    jax.block_until_ready(loss)
    assert loss.shape == () and bool(jnp.isfinite(loss))
    print("KERNEL_OK")
</pallas_src>

<mosaic_0001>
module attributes {stable_mosaic.version = 11 : i64} {
  func.func @_momentum_kernel(%arg0: memref<1x256xf32, #tpu.memory_space<vmem>>, %arg1: memref<1x128xf32, #tpu.memory_space<vmem>>, %arg2: memref<8x256xf32, #tpu.memory_space<vmem>>, %arg3: memref<256x128xf32, #tpu.memory_space<vmem>>, %arg4: memref<1x256xf32, #tpu.memory_space<vmem>>, %arg5: memref<1x128xf32, #tpu.memory_space<vmem>>, %arg6: memref<8x256xf32, #tpu.memory_space<vmem>>, %arg7: memref<256x128xf32, #tpu.memory_space<vmem>>, %arg8: memref<1x256xf32, #tpu.memory_space<vmem>>, %arg9: memref<1x128xf32, #tpu.memory_space<vmem>>, %arg10: memref<8x256xf32, #tpu.memory_space<vmem>>, %arg11: memref<256x128xf32, #tpu.memory_space<vmem>>) attributes {dimension_semantics = [], scalar_prefetch = 0 : i64, scratch_operands = 0 : i64, tpu.core_type = #tpu.core_type<tc>} {
    %c0 = arith.constant 0 : index
    %c0_0 = arith.constant 0 : index
    %0 = vector.load %arg4[%c0, %c0_0] : memref<1x256xf32, #tpu.memory_space<vmem>>, vector<1x256xf32>
    %cst = arith.constant 9.900000e-01 : f32
    %1 = vector.broadcast %cst : f32 to vector<1x256xf32>
    %2 = arith.mulf %0, %1 : vector<1x256xf32>
    %c0_1 = arith.constant 0 : index
    %c0_2 = arith.constant 0 : index
    %3 = vector.load %arg0[%c0_1, %c0_2] : memref<1x256xf32, #tpu.memory_space<vmem>>, vector<1x256xf32>
    %cst_3 = arith.constant 0.00999999977 : f32
    %4 = vector.broadcast %cst_3 : f32 to vector<1x256xf32>
    %5 = arith.mulf %3, %4 : vector<1x256xf32>
    %6 = arith.addf %2, %5 : vector<1x256xf32>
    %c0_4 = arith.constant 0 : index
    %c0_5 = arith.constant 0 : index
    %7 = vector.load %arg8[%c0_4, %c0_5] : memref<1x256xf32, #tpu.memory_space<vmem>>, vector<1x256xf32>
    tpu.vector_store %arg8[%c0_4, %c0_5], %6 {strides = array<i32>} : memref<1x256xf32, #tpu.memory_space<vmem>>, vector<1x256xf32>,
    %c0_6 = arith.constant 0 : index
    %c0_7 = arith.constant 0 : index
    %8 = vector.load %arg5[%c0_6, %c0_7] : memref<1x128xf32, #tpu.memory_space<vmem>>, vector<1x128xf32>
    %cst_8 = arith.constant 9.900000e-01 : f32
    %9 = vector.broadcast %cst_8 : f32 to vector<1x128xf32>
    %10 = arith.mulf %8, %9 : vector<1x128xf32>
    %c0_9 = arith.constant 0 : index
    %c0_10 = arith.constant 0 : index
    %11 = vector.load %arg1[%c0_9, %c0_10] : memref<1x128xf32, #tpu.memory_space<vmem>>, vector<1x128xf32>
    %cst_11 = arith.constant 0.00999999977 : f32
    %12 = vector.broadcast %cst_11 : f32 to vector<1x128xf32>
    %13 = arith.mulf %11, %12 : vector<1x128xf32>
    %14 = arith.addf %10, %13 : vector<1x128xf32>
    %c0_12 = arith.constant 0 : index
    %c0_13 = arith.constant 0 : index
    %15 = vector.load %arg9[%c0_12, %c0_13] : memref<1x128xf32, #tpu.memory_space<vmem>>, vector<1x128xf32>
    tpu.vector_store %arg9[%c0_12, %c0_13], %14 {strides = array<i32>} : memref<1x128xf32, #tpu.memory_space<vmem>>, vector<1x128xf32>,
    %c0_14 = arith.constant 0 : index
    %c0_15 = arith.constant 0 : index
    %16 = vector.load %arg6[%c0_14, %c0_15] : memref<8x256xf32, #tpu.memory_space<vmem>>, vector<8x256xf32>
    %cst_16 = arith.constant 9.900000e-01 : f32
    %17 = vector.broadcast %cst_16 : f32 to vector<8x256xf32>
    %18 = arith.mulf %16, %17 : vector<8x256xf32>
    %c0_17 = arith.constant 0 : index
    %c0_18 = arith.constant 0 : index
    %19 = vector.load %arg2[%c0_17, %c0_18] : memref<8x256xf32, #tpu.memory_space<vmem>>, vector<8x256xf32>
    %cst_19 = arith.constant 0.00999999977 : f32
    %20 = vector.broadcast %cst_19 : f32 to vector<8x256xf32>
    %21 = arith.mulf %19, %20 : vector<8x256xf32>
    %22 = arith.addf %18, %21 : vector<8x256xf32>
    %c0_20 = arith.constant 0 : index
    %c0_21 = arith.constant 0 : index
    %23 = vector.load %arg10[%c0_20, %c0_21] : memref<8x256xf32, #tpu.memory_space<vmem>>, vector<8x256xf32>
    tpu.vector_store %arg10[%c0_20, %c0_21], %22 {strides = array<i32>} : memref<8x256xf32, #tpu.memory_space<vmem>>, vector<8x256xf32>,
    %c0_22 = arith.constant 0 : index
    %c0_23 = arith.constant 0 : index
    %24 = vector.load %arg7[%c0_22, %c0_23] : memref<256x128xf32, #tpu.memory_space<vmem>>, vector<256x128xf32>
    %cst_24 = arith.constant 9.900000e-01 : f32
    %25 = vector.broadcast %cst_24 : f32 to vector<256x128xf32>
    %26 = arith.mulf %24, %25 : vector<256x128xf32>
    %c0_25 = arith.constant 0 : index
    %c0_26 = arith.constant 0 : index
    %27 = vector.load %arg3[%c0_25, %c0_26] : memref<256x128xf32, #tpu.memory_space<vmem>>, vector<256x128xf32>
    %cst_27 = arith.constant 0.00999999977 : f32
    %28 = vector.broadcast %cst_27 : f32 to vector<256x128xf32>
    %29 = arith.mulf %27, %28 : vector<256x128xf32>
    %30 = arith.addf %26, %29 : vector<256x128xf32>
    %c0_28 = arith.constant 0 : index
    %c0_29 = arith.constant 0 : index
    %31 = vector.load %arg11[%c0_28, %c0_29] : memref<256x128xf32, #tpu.memory_space<vmem>>, vector<256x128xf32>
    tpu.vector_store %arg11[%c0_28, %c0_29], %30 {strides = array<i32>} : memref<256x128xf32, #tpu.memory_space<vmem>>, vector<256x128xf32>,
    return
  }
}

module attributes {stable_mosaic.version = 11 : i64} {
  func.func @_fused_view_loss_kernel(%arg0: i32, %arg1: memref<1x8x8x256xf32, #tpu.memory_space<vmem>>, %arg2: memref<1x8x8x256xf32, #tpu.memory_space<vmem>>, %arg3: memref<8x256xbf16, #tpu.memory_space<vmem>>, %arg4: memref<1x256xf32, #tpu.memory_space<vmem>>, %arg5: memref<256x128xbf16, #tpu.memory_space<vmem>>, %arg6: memref<1x128xf32, #tpu.memory_space<vmem>>, %arg7: memref<8x256xbf16, #tpu.memory_space<vmem>>, %arg8: memref<1x256xf32, #tpu.memory_space<vmem>>, %arg9: memref<256x128xbf16, #tpu.memory_space<vmem>>, %arg10: memref<1x128xf32, #tpu.memory_space<vmem>>, %arg11: memref<128x256xbf16, #tpu.memory_space<vmem>>, %arg12: memref<1x256xf32, #tpu.memory_space<vmem>>, %arg13: memref<1x256xf32, #tpu.memory_space<vmem>>, %arg14: memref<256x128xbf16, #tpu.memory_space<vmem>>, %arg15: memref<1x8x128xf32, #tpu.memory_space<vmem>>) attributes {dimension_semantics = [#tpu.dimension_semantics<parallel>], iteration_bounds = array<i64: 2>, scalar_prefetch = 0 : i64, scratch_operands = 0 : i64, tpu.core_type = #tpu.core_type<tc>, window_params = [{transform_indices = @transform_0, window_bounds = array<i64: 1, 8, 8, 256>}, {transform_indices = @transform_1, window_bounds = array<i64: 1, 8, 8, 256>}, {pipeline_mode = #tpu.pipeline_mode<synchronous>, transform_indices = @transform_2, window_bounds = array<i64: 8, 256>}, {pipeline_mode = #tpu.pipeline_mode<synchronous>, transform_indices = @transform_3, window_bounds = array<i64: 1, 256>}, {pipeline_mode = #tpu.pipeline_mode<synchronous>, transform_indices = @transform_4, window_bounds = array<i64: 256, 128>}, {pipeline_mode = #tpu.pipeline_mode<synchronous>, transform_indices = @transform_5, window_bounds = array<i64: 1, 128>}, {pipeline_mode = #tpu.pipeline_mode<synchronous>, transform_indices = @transform_6, window_bounds = array<i64: 8, 256>}, {pipeline_mode = #tpu.pipeline_mode<synchronous>, transform_indices = @transform_7, window_bounds = array<i64: 1, 256>}, {pipeline_mode = #tpu.pipeline_mode<synchronous>, transform_indices = @transform_8, window_bounds = array<i64: 256, 128>}, {pipeline_mode = #tpu.pipeline_mode<synchronous>, transform_indices = @transform_9, window_bounds = array<i64: 1, 128>}, {pipeline_mode = #tpu.pipeline_mode<synchronous>, transform_indices = @transform_10, window_bounds = array<i64: 128, 256>}, {pipeline_mode = #tpu.pipeline_mode<synchronous>, transform_indices = @transform_11, window_bounds = array<i64: 1, 256>}, {pipeline_mode = #tpu.pipeline_mode<synchronous>, transform_indices = @transform_12, window_bounds = array<i64: 1, 256>}, {pipeline_mode = #tpu.pipeline_mode<synchronous>, transform_indices = @transform_13, window_bounds = array<i64: 256, 128>}, {transform_indices = @transform_14, window_bounds = array<i64: 1, 8, 128>}]} {
    %c0 = arith.constant 0 : index
    %c0_0 = arith.constant 0 : index
    %c0_1 = arith.constant 0 : index
    %c0_2 = arith.constant 0 : index
    %0 = vector.load %arg1[%c0, %c0_0, %c0_1, %c0_2] : memref<1x8x8x256xf32, #tpu.memory_space<vmem>>, vector<1x8x8x256xf32>
    %cst = arith.constant dense<0.000000e+00> : vector<1x8x8xf32>
    %1 = vector.multi_reduction <add>, %0, %cst [3] : vector<1x8x8x256xf32> to vector<1x8x8xf32>
    %cst_3 = arith.constant 2.560000e+02 : f32
    %2 = vector.broadcast %cst_3 : f32 to vector<1x8x8xf32>
    %3 = arith.divf %1, %2 : vector<1x8x8xf32>
    %4 = vector.shape_cast %3 : vector<1x8x8xf32> to vector<8x8xf32>
    %c0_4 = arith.constant 0 : index
    %c0_5 = arith.constant 0 : index
    %c0_6 = arith.constant 0 : index
    %c0_7 = arith.constant 0 : index
    %5 = vector.load %arg2[%c0_4, %c0_5, %c0_6, %c0_7] : memref<1x8x8x256xf32, #tpu.memory_space<vmem>>, vector<1x8x8x256xf32>
    %cst_8 = arith.constant dense<0.000000e+00> : vector<1x8x8xf32>
    %6 = vector.multi_reduction <add>, %5, %cst_8 [3] : vector<1x8x8x256xf32> to vector<1x8x8xf32>
    %cst_9 = arith.constant 2.560000e+02 : f32
    %7 = vector.broadcast %cst_9 : f32 to vector<1x8x8xf32>
    %8 = arith.divf %6, %7 : vector<1x8x8xf32>
    %9 = vector.shape_cast %8 : vector<1x8x8xf32> to vector<8x8xf32>
    %10 = arith.truncf %4 : vector<8x8xf32> to vector<8x8xbf16>
    %c0_10 = arith.constant 0 : index
    %c0_11 = arith.constant 0 : index
    %11 = vector.load %arg3[%c0_10, %c0_11] : memref<8x256xbf16, #tpu.memory_space<vmem>>, vector<8x256xbf16>
    %cst_12 = arith.constant dense<0.000000e+00> : vector<8x256xf32>
    %12 = tpu.matmul %10, %11, %cst_12 {dimension_numbers = #tpu.dot_dimension_numbers<[1], [0], [0], [1], [0, 0, 1, 1], [], []>} : vector<8x8xbf16>, vector<8x256xbf16>, vector<8x256xf32> -> vector<8x256xf32>
    %c0_13 = arith.constant 0 : index
    %c0_14 = arith.constant 0 : index
    %13 = vector.load %arg4[%c0_13, %c0_14] : memref<1x256xf32, #tpu.memory_space<vmem>>, vector<1x256xf32>
    %14 = vector.broadcast %13 : vector<1x256xf32> to vector<8x256xf32>
    %15 = arith.addf %12, %14 : vector<8x256xf32>
    %cst_15 = arith.constant 0.000000e+00 : f32
    %16 = vector.broadcast %cst_15 : f32 to vector<8x256xf32>
    %17 = arith.maximumf %15, %16 : vector<8x256xf32>
    %18 = arith.truncf %17 : vector<8x256xf32> to vector<8x256xbf16>
    %c0_16 = arith.constant 0 : index
    %c0_17 = arith.constant 0 : index
    %19 = vector.load %arg5[%c0_16, %c0_17] : memref<256x128xbf16, #tpu.memory_space<vmem>>, vector<256x128xbf16>
    %cst_18 = arith.constant dense<0.000000e+00> : vector<8x128xf32>
    %20 = tpu.matmul %18, %19, %cst_18 {dimension_numbers = #tpu.dot_dimension_numbers<[1], [0], [0], [1], [0, 0, 1, 1], [], []>} : vector<8x256xbf16>, vector<256x128xbf16>, vector<8x128xf32> -> vector<8x128xf32>
    %c0_19 = arith.constant 0 : index
    %c0_20 = arith.constant 0 : index
    %21 = vector.load %arg6[%c0_19, %c0_20] : memref<1x128xf32, #tpu.memory_space<vmem>>, vector<1x128xf32>
    %22 = vector.broadcast %21 : vector<1x128xf32> to vector<8x128xf32>
    %23 = arith.addf %20, %22 : vector<8x128xf32>
    %24 = arith.truncf %23 : vector<8x128xf32> to vector<8x128xbf16>
    %c0_21 = arith.constant 0 : index
    %c0_22 = arith.constant 0 : index
    %25 = vector.load %arg11[%c0_21, %c0_22] : memref<128x256xbf16, #tpu.memory_space<vmem>>, vector<128x256xbf16>
    %cst_23 = arith.constant dense<0.000000e+00> : vector<8x256xf32>
    %26 = tpu.matmul %24, %25, %cst_23 {dimension_numbers = #tpu.dot_dimension_numbers<[1], [0], [0], [1], [0, 0, 1, 1], [], []>} : vector<8x128xbf16>, vector<128x256xbf16>, vector<8x256xf32> -> vector<8x256xf32>
    %cst_24 = arith.constant dense<0.000000e+00> : vector<256xf32>
    %27 = vector.multi_reduction <add>, %26, %cst_24 [0] : vector<8x256xf32> to vector<256xf32>
    %28 = vector.shape_cast %27 : vector<256xf32> to vector<1x256xf32>
    %cst_25 = arith.constant 8.000000e+00 : f32
    %29 = vector.broadcast %cst_25 : f32 to vector<1x256xf32>
    %30 = arith.divf %28, %29 : vector<1x256xf32>
    %31 = vector.broadcast %30 : vector<1x256xf32> to vector<8x256xf32>
    %32 = arith.subf %26, %31 : vector<8x256xf32>
    %33 = arith.mulf %32, %32 : vector<8x256xf32>
    %cst_26 = arith.constant dense<0.000000e+00> : vector<256xf32>
    %34 = vector.multi_reduction <add>, %33, %cst_26 [0] : vector<8x256xf32> to vector<256xf32>
    %35 = vector.shape_cast %34 : vector<256xf32> to vector<1x256xf32>
    %cst_27 = arith.constant 8.000000e+00 : f32
    %36 = vector.broadcast %cst_27 : f32 to vector<1x256xf32>
    %37 = arith.divf %35, %36 : vector<1x256xf32>
    %38 = vector.broadcast %30 : vector<1x256xf32> to vector<8x256xf32>
    %39 = arith.subf %26, %38 : vector<8x256xf32>
    %cst_28 = arith.constant 9.99999974E-6 : f32
    %40 = vector.broadcast %cst_28 : f32 to vector<1x256xf32>
    %41 = arith.addf %37, %40 : vector<1x256xf32>
    %42 = math.rsqrt %41 : vector<1x256xf32>
    %43 = vector.broadcast %42 : vector<1x256xf32> to vector<8x256xf32>
    %44 = arith.mulf %39, %43 : vector<8x256xf32>
    %c0_29 = arith.constant 0 : index
    %c0_30 = arith.constant 0 : index
    %45 = vector.load %arg12[%c0_29, %c0_30] : memref<1x256xf32, #tpu.memory_space<vmem>>, vector<1x256xf32>
    %46 = vector.broadcast %45 : vector<1x256xf32> to vector<8x256xf32>
    %47 = arith.mulf %44, %46 : vector<8x256xf32>
    %c0_31 = arith.constant 0 : index
    %c0_32 = arith.constant 0 : index
    %48 = vector.load %arg13[%c0_31, %c0_32] : memref<1x256xf32, #tpu.memory_space<vmem>>, vector<1x256xf32>
    %49 = vector.broadcast %48 : vector<1x256xf32> to vector<8x256xf32>
    %50 = arith.addf %47, %49 : vector<8x256xf32>
    %cst_33 = arith.constant 0.000000e+00 : f32
    %51 = vector.broadcast %cst_33 : f32 to vector<8x256xf32>
    %52 = arith.maximumf %50, %51 : vector<8x256xf32>
    %53 = arith.truncf %52 : vector<8x256xf32> to vector<8x256xbf16>
    %c0_34 = arith.constant 0 : index
    %c0_35 = arith.constant 0 : index
    %54 = vector.load %arg14[%c0_34, %c0_35] : memref<256x128xbf16, #tpu.memory_space<vmem>>, vector<256x128xbf16>
    %cst_36 = arith.constant dense<0.000000e+00> : vector<8x128xf32>
    %55 = tpu.matmul %53, %54, %cst_36 {dimension_numbers = #tpu.dot_dimension_numbers<[1], [0], [0], [1], [0, 0, 1, 1], [], []>} : vector<8x256xbf16>, vector<256x128xbf16>, vector<8x128xf32> -> vector<8x128xf32>
    %56 = arith.truncf %9 : vector<8x8xf32> to vector<8x8xbf16>
    %c0_37 = arith.constant 0 : index
    %c0_38 = arith.constant 0 : index
    %57 = vector.load %arg7[%c0_37, %c0_38] : memref<8x256xbf16, #tpu.memory_space<vmem>>, vector<8x256xbf16>
    %cst_39 = arith.constant dense<0.000000e+00> : vector<8x256xf32>
    %58 = tpu.matmul %56, %57, %cst_39 {dimension_numbers = #tpu.dot_dimension_numbers<[1], [0], [0], [1], [0, 0, 1, 1], [], []>} : vector<8x8xbf16>, vector<8x256xbf16>, vector<8x256xf32> -> vector<8x256xf32>
    %c0_40 = arith.constant 0 : index
    %c0_41 = arith.constant 0 : index
    %59 = vector.load %arg8[%c0_40, %c0_41] : memref<1x256xf32, #tpu.memory_space<vmem>>, vector<1x256xf32>
    %60 = vector.broadcast %59 : vector<1x256xf32> to vector<8x256xf32>
    %61 = arith.addf %58, %60 : vector<8x256xf32>
    %cst_42 = arith.constant 0.000000e+00 : f32
    %62 = vector.broadcast %cst_42 : f32 to vector<8x256xf32>
    %63 = arith.maximumf %61, %62 : vector<8x256xf32>
    %64 = arith.truncf %63 : vector<8x256xf32> to vector<8x256xbf16>
    %c0_43 = arith.constant 0 : index
    %c0_44 = arith.constant 0 : index
    %65 = vector.load %arg9[%c0_43, %c0_44] : memref<256x128xbf16, #tpu.memory_space<vmem>>, vector<256x128xbf16>
    %cst_45 = arith.constant dense<0.000000e+00> : vector<8x128xf32>
    %66 = tpu.matmul %64, %65, %cst_45 {dimension_numbers = #tpu.dot_dimension_numbers<[1], [0], [0], [1], [0, 0, 1, 1], [], []>} : vector<8x256xbf16>, vector<256x128xbf16>, vector<8x128xf32> -> vector<8x128xf32>
    %c0_46 = arith.constant 0 : index
    %c0_47 = arith.constant 0 : index
    %67 = vector.load %arg10[%c0_46, %c0_47] : memref<1x128xf32, #tpu.memory_space<vmem>>, vector<1x128xf32>
    %68 = vector.broadcast %67 : vector<1x128xf32> to vector<8x128xf32>
    %69 = arith.addf %66, %68 : vector<8x128xf32>
    %70 = arith.mulf %55, %55 : vector<8x128xf32>
    %cst_48 = arith.constant dense<0.000000e+00> : vector<8xf32>
    %71 = vector.multi_reduction <add>, %70, %cst_48 [1] : vector<8x128xf32> to vector<8xf32>
    %72 = vector.shape_cast %71 : vector<8xf32> to vector<8x1xf32>
    %cst_49 = arith.constant 1.000000e-24 : f32
    %73 = vector.broadcast %cst_49 : f32 to vector<8x1xf32>
    %74 = arith.maximumf %72, %73 : vector<8x1xf32>
    %75 = math.rsqrt %74 : vector<8x1xf32>
    %76 = vector.broadcast %75 : vector<8x1xf32> to vector<8x128xf32>
    %77 = arith.mulf %55, %76 : vector<8x128xf32>
    %78 = arith.mulf %69, %69 : vector<8x128xf32>
    %cst_50 = arith.constant dense<0.000000e+00> : vector<8xf32>
    %79 = vector.multi_reduction <add>, %78, %cst_50 [1] : vector<8x128xf32> to vector<8xf32>
    %80 = vector.shape_cast %79 : vector<8xf32> to vector<8x1xf32>
    %cst_51 = arith.constant 1.000000e-24 : f32
    %81 = vector.broadcast %cst_51 : f32 to vector<8x1xf32>
    %82 = arith.maximumf %80, %81 : vector<8x1xf32>
    %83 = math.rsqrt %82 : vector<8x1xf32>
    %84 = vector.broadcast %83 : vector<8x1xf32> to vector<8x128xf32>
    %85 = arith.mulf %69, %84 : vector<8x128xf32>
    %cst_52 = arith.constant dense<0.000000e+00> : vector<8x8xf32>
    %86 = tpu.matmul %77, %85, %cst_52 {dimension_numbers = #tpu.dot_dimension_numbers<[1], [1], [0], [0], [0, 0, 1, 0], [], []>} : vector<8x128xf32>, vector<8x128xf32>, vector<8x8xf32> -> vector<8x8xf32>
    %cst_53 = arith.constant 1.000000e+00 : f32
    %87 = vector.broadcast %cst_53 : f32 to vector<8x8xf32>
    %88 = arith.mulf %86, %87 : vector<8x8xf32>
    %89 = arith.mulf %77, %85 : vector<8x128xf32>
    %cst_54 = arith.constant dense<0.000000e+00> : vector<8xf32>
    %90 = vector.multi_reduction <add>, %89, %cst_54 [1] : vector<8x128xf32> to vector<8xf32>
    %91 = vector.shape_cast %90 : vector<8xf32> to vector<8x1xf32>
    %cst_55 = arith.constant 1.000000e+00 : f32
    %92 = vector.broadcast %cst_55 : f32 to vector<8x1xf32>
    %93 = arith.mulf %91, %92 : vector<8x1xf32>
    %cst_56 = arith.constant dense<0xFF800000> : vector<8xf32>
    %94 = vector.multi_reduction <maximumf>, %88, %cst_56 [1] : vector<8x8xf32> to vector<8xf32>
    %95 = vector.shape_cast %94 : vector<8xf32> to vector<8x1xf32>
    %96 = vector.broadcast %95 : vector<8x1xf32> to vector<8x8xf32>
    %97 = arith.subf %88, %96 : vector<8x8xf32>
    %98 = math.exp %97 : vector<8x8xf32>
    %cst_57 = arith.constant dense<0.000000e+00> : vector<8xf32>
    %99 = vector.multi_reduction <add>, %98, %cst_57 [1] : vector<8x8xf32> to vector<8xf32>
    %100 = vector.shape_cast %99 : vector<8xf32> to vector<8x1xf32>
    %101 = math.log %100 : vector<8x1xf32>
    %102 = arith.addf %101, %95 : vector<8x1xf32>
    %103 = arith.subf %102, %93 : vector<8x1xf32>
    %104 = vector.shape_cast %103 : vector<8x1xf32> to vector<1x8x1xf32>
    %cst_58 = arith.constant dense<0.000000e+00> : vector<1xf32>
    %105 = vector.multi_reduction <add>, %104, %cst_58 [1, 2] : vector<1x8x1xf32> to vector<1xf32>
    %106 = vector.shape_cast %105 : vector<1xf32> to vector<1x1x1xf32>
    %107 = vector.extract %106[0, 0, 0] : f32 from vector<1x1x1xf32>
    %cst_59 = arith.constant 8.000000e+00 : f32
    %108 = arith.divf %107, %cst_59 : f32
    %cst_60 = arith.constant 2.000000e+00 : f32
    %109 = arith.mulf %108, %cst_60 : f32
    %110 = vector.broadcast %109 : f32 to vector<1x8x128xf32>
    %c0_61 = arith.constant 0 : index
    %c0_62 = arith.constant 0 : index
    %c0_63 = arith.constant 0 : index
    %111 = vector.load %arg15[%c0_61, %c0_62, %c0_63] : memref<1x8x128xf32, #tpu.memory_space<vmem>>, vector<1x8x128xf32>
    tpu.vector_store %arg15[%c0_61, %c0_62, %c0_63], %110 {strides = array<i32>} : memref<1x8x128xf32, #tpu.memory_space<vmem>>, vector<1x8x128xf32>,
    return
  }
  func.func @transform_0(%arg0: i32) -> (i32, i32, i32, i32) {
    %c0_i32 = arith.constant 0 : i32
    %c0_i32_0 = arith.constant 0 : i32
    %c0_i32_1 = arith.constant 0 : i32
    %c0_i32_2 = arith.constant 0 : i32
    return %arg0, %c0_i32, %c0_i32_0, %c0_i32_1 : i32, i32, i32, i32
  }
  func.func @transform_1(%arg0: i32) -> (i32, i32, i32, i32) {
    %c1_i32 = arith.constant 1 : i32
    %0 = arith.subi %c1_i32, %arg0 : i32
    %c0_i32 = arith.constant 0 : i32
    %c0_i32_0 = arith.constant 0 : i32
    %c0_i32_1 = arith.constant 0 : i32
    %c0_i32_2 = arith.constant 0 : i32
    return %0, %c0_i32, %c0_i32_0, %c0_i32_1 : i32, i32, i32, i32
  }
  func.func @transform_2(%arg0: i32) -> (i32, i32) {
    %c0_i32 = arith.constant 0 : i32
    %c0_i32_0 = arith.constant 0 : i32
    %c0_i32_1 = arith.constant 0 : i32
    return %c0_i32, %c0_i32_0 : i32, i32
  }
  func.func @transform_3(%arg0: i32) -> (i32, i32) {
    %c0_i32 = arith.constant 0 : i32
    %c0_i32_0 = arith.constant 0 : i32
    %c0_i32_1 = arith.constant 0 : i32
    return %c0_i32, %c0_i32_0 : i32, i32
  }
  func.func @transform_4(%arg0: i32) -> (i32, i32) {
    %c0_i32 = arith.constant 0 : i32
    %c0_i32_0 = arith.constant 0 : i32
    %c0_i32_1 = arith.constant 0 : i32
    return %c0_i32, %c0_i32_0 : i32, i32
  }
  func.func @transform_5(%arg0: i32) -> (i32, i32) {
    %c0_i32 = arith.constant 0 : i32
    %c0_i32_0 = arith.constant 0 : i32
    %c0_i32_1 = arith.constant 0 : i32
    return %c0_i32, %c0_i32_0 : i32, i32
  }
  func.func @transform_6(%arg0: i32) -> (i32, i32) {
    %c0_i32 = arith.constant 0 : i32
    %c0_i32_0 = arith.constant 0 : i32
    %c0_i32_1 = arith.constant 0 : i32
    return %c0_i32, %c0_i32_0 : i32, i32
  }
  func.func @transform_7(%arg0: i32) -> (i32, i32) {
    %c0_i32 = arith.constant 0 : i32
    %c0_i32_0 = arith.constant 0 : i32
    %c0_i32_1 = arith.constant 0 : i32
    return %c0_i32, %c0_i32_0 : i32, i32
  }
  func.func @transform_8(%arg0: i32) -> (i32, i32) {
    %c0_i32 = arith.constant 0 : i32
    %c0_i32_0 = arith.constant 0 : i32
    %c0_i32_1 = arith.constant 0 : i32
    return %c0_i32, %c0_i32_0 : i32, i32
  }
  func.func @transform_9(%arg0: i32) -> (i32, i32) {
    %c0_i32 = arith.constant 0 : i32
    %c0_i32_0 = arith.constant 0 : i32
    %c0_i32_1 = arith.constant 0 : i32
    return %c0_i32, %c0_i32_0 : i32, i32
  }
  func.func @transform_10(%arg0: i32) -> (i32, i32) {
    %c0_i32 = arith.constant 0 : i32
    %c0_i32_0 = arith.constant 0 : i32
    %c0_i32_1 = arith.constant 0 : i32
    return %c0_i32, %c0_i32_0 : i32, i32
  }
  func.func @transform_11(%arg0: i32) -> (i32, i32) {
    %c0_i32 = arith.constant 0 : i32
    %c0_i32_0 = arith.constant 0 : i32
    %c0_i32_1 = arith.constant 0 : i32
    return %c0_i32, %c0_i32_0 : i32, i32
  }
  func.func @transform_12(%arg0: i32) -> (i32, i32) {
    %c0_i32 = arith.constant 0 : i32
    %c0_i32_0 = arith.constant 0 : i32
    %c0_i32_1 = arith.constant 0 : i32
    return %c0_i32, %c0_i32_0 : i32, i32
  }
  func.func @transform_13(%arg0: i32) -> (i32, i32) {
    %c0_i32 = arith.constant 0 : i32
    %c0_i32_0 = arith.constant 0 : i32
    %c0_i32_1 = arith.constant 0 : i32
    return %c0_i32, %c0_i32_0 : i32, i32
  }
  func.func @transform_14(%arg0: i32) -> (i32, i32, i32) {
    %c0_i32 = arith.constant 0 : i32
    %c0_i32_0 = arith.constant 0 : i32
    %c0_i32_1 = arith.constant 0 : i32
    return %arg0, %c0_i32, %c0_i32_0 : i32, i32, i32
  }
}

</mosaic_0001>

<llo_original>
// kernel: moco_forward.2
$region0: #{moco_forward.2}
  #allocation0 [shape = 'u32[]', space=smem, size = 0x4, offset = 0x4, fixed_abs, tag = 'smem constant byte address 0x4 - core index']
  #allocation1 [shape = 'u32[144,128]{1,0:T(1,128)}', space=vmem, size = 0x12000, scoped, tag = 'internal scratch']
  %s0 = inlined_call_operand.vmem [shape: f32[1,256], index: 0, kind: input, shape index: {}]
  %s1 = inlined_call_operand.hbm [shape: f32[1,128], index: 1, kind: input, shape index: {}]
  %s2 = inlined_call_operand.hbm [shape: f32[8,256], index: 2, kind: input, shape index: {}]
  %s3 = inlined_call_operand.hbm [shape: f32[256,128], index: 3, kind: input, shape index: {}]
  %s4 = inlined_call_operand.vmem [shape: f32[1,256], index: 4, kind: input, shape index: {}, may-alias: {4,8}]
  %s5 = inlined_call_operand.vmem [shape: f32[1,128], index: 5, kind: input, shape index: {}, may-alias: {5,9}]
  %s6 = inlined_call_operand.vmem [shape: f32[8,256], index: 6, kind: input, shape index: {}, may-alias: {6,10}]
  %s7 = inlined_call_operand.hbm [shape: f32[256,128], index: 7, kind: input, shape index: {}, may-alias: {7,11}]
  %s8 = inlined_call_operand.vmem [shape: f32[1,256], index: 8, kind: output, shape index: {0}, may-alias: {4,8}]
  %s9 = inlined_call_operand.vmem [shape: f32[1,128], index: 9, kind: output, shape index: {1}, may-alias: {5,9}]
  %s10 = inlined_call_operand.vmem [shape: f32[8,256], index: 10, kind: output, shape index: {2}, may-alias: {6,10}]
  %s11 = inlined_call_operand.hbm [shape: f32[256,128], index: 11, kind: output, shape index: {3}, may-alias: {7,11}]
  %12 = xla_tuple %s8, %s9, %s10, %s11
  %s13 = sld [smem:[#allocation0]]
  $region82: #{moco_forward.2} parent=0
    _
  %s15 = ssub.s32 1, %s13
  %s16 = scalar_select 0, %s15, %s13
  $region1: #{moco_forward.2} parent=0
    #allocation2 [shape = 'u8[512]{0}', space=vmem, size = 0x400, scoped, tag = 'input window, operand 1, single buffered']
    #allocation3 [shape = 's32[1]{0}', space=sflag, size = 0x4, scoped, tag = 'scoped memory for moco_forward.2']
    #allocation4 [shape = 's32[1]{0}', space=sflag, size = 0x4, scoped, tag = 'scoped memory for moco_forward.2']
    #allocation5 [shape = 'u8[8192]{0}', space=vmem, size = 0x2000, scoped, tag = 'input window, operand 2, single buffered']
    #allocation6 [shape = 's32[1]{0}', space=sflag, size = 0x4, scoped, tag = 'scoped memory for moco_forward.2']
    #allocation7 [shape = 'u8[131072]{0}', space=vmem, size = 0x20000, scoped, tag = 'input window, operand 3, single buffered']
    #allocation8 [shape = 'u8[131072]{0}', space=vmem, size = 0x20000, scoped, tag = 'input window, operand 7, single buffered']
    #allocation9 [shape = 's32[1]{0}', space=sflag, size = 0x4, scoped, tag = 'scoped memory for moco_forward.2']
    #allocation10 [shape = 'u8[131072]{0}', space=vmem, size = 0x20000, scoped, tag = 'output window, operand 3, single buffered']
    %17 = vsyncpa [#allocation3], 0
    %18 = vsyncpa [#allocation6], 0
    %19 = vsyncpa [#allocation9], 0
    %20 = vsyncpa [#allocation4], 0
    // Predicated region
    $region2: #{moco_forward.2} parent=1 // pred_check
      _
    $region3: #{moco_forward.2} parent=1 // pred_check_branch
      %22 = sbr.rel (0) target = $region5
    $region4: #{moco_forward.2} parent=1 // pred_region
      _
    $region5: #{moco_forward.2} parent=1 // pred_fallthru
      _
    // Predicated region
    $region6: #{moco_forward.2} parent=1 // pred_check
      _
    $region7: #{moco_forward.2} parent=1 // pred_check_branch
      %24 = sbr.rel (0) target = $region9
    $region8: #{moco_forward.2} parent=1 // pred_region
      %s26 = ssub.s32 16, 16
      %27 = vsyncadd [#allocation3], %s26
      %s29 = sshll.u32 [#allocation2], 4
      %s30 = int_to_ptr.vmem [resolvable:$true] %s29
      %32 = dma.hbm_to_vmem [thread:$0]  %s1, 16, %s30, [#allocation3]
    $region9: #{moco_forward.2} parent=1 // pred_fallthru
      _
    // Predicated region
    $region10: #{moco_forward.2} parent=1 // pred_check
      _
    $region11: #{moco_forward.2} parent=1 // pred_check_branch
      %34 = sbr.rel (0) target = $region13
    $region12: #{moco_forward.2} parent=1 // pred_region
      %s36 = ssub.s32 256, 256
      %37 = vsyncadd [#allocation6], %s36
      %s39 = sshll.u32 [#allocation5], 4
      %s40 = int_to_ptr.vmem [resolvable:$true] %s39
      %42 = dma.hbm_to_vmem [thread:$0]  %s2, 256, %s40, [#allocation6]
    $region13: #{moco_forward.2} parent=1 // pred_fallthru
      _
    // Predicated region
    $region14: #{moco_forward.2} parent=1 // pred_check
      _
    $region15: #{moco_forward.2} parent=1 // pred_check_branch
      %44 = sbr.rel (0) target = $region17
    $region16: #{moco_forward.2} parent=1 // pred_region
      %s46 = ssub.s32 4096, 4096
      %47 = vsyncadd [#allocation6], %s46
      %s48 = sshll.u32 [#allocation7], 4
      %s49 = int_to_ptr.vmem [resolvable:$true] %s48
      %54 = dma.hbm_to_vmem [thread:$0]  %s3, 4096, %s49, [#allocation6], 128, 128, 8
    $region17: #{moco_forward.2} parent=1 // pred_fallthru
      _
    // Predicated region
    $region18: #{moco_forward.2} parent=1 // pred_check
      _
    $region19: #{moco_forward.2} parent=1 // pred_check_branch
      %56 = sbr.rel (0) target = $region21
    $region20: #{moco_forward.2} parent=1 // pred_region
      _
    $region21: #{moco_forward.2} parent=1 // pred_fallthru
      _
    // Predicated region
    $region22: #{moco_forward.2} parent=1 // pred_check
      _
    $region23: #{moco_forward.2} parent=1 // pred_check_branch
      %58 = sbr.rel (0) target = $region25
    $region24: #{moco_forward.2} parent=1 // pred_region
      _
    $region25: #{moco_forward.2} parent=1 // pred_fallthru
      _
    // Predicated region
    $region26: #{moco_forward.2} parent=1 // pred_check
      _
    $region27: #{moco_forward.2} parent=1 // pred_check_branch
      %60 = sbr.rel (0) target = $region29
    $region28: #{moco_forward.2} parent=1 // pred_region
      _
    $region29: #{moco_forward.2} parent=1 // pred_fallthru
      _
    // Predicated region
    $region30: #{moco_forward.2} parent=1 // pred_check
      _
    $region31: #{moco_forward.2} parent=1 // pred_check_branch
      %62 = sbr.rel (0) target = $region33
    $region32: #{moco_forward.2} parent=1 // pred_region
      %s64 = ssub.s32 4096, 4096
      %65 = vsyncadd [#allocation9], %s64
      %s66 = sshll.u32 [#allocation8], 4
      %s67 = int_to_ptr.vmem [resolvable:$true] %s66
      %72 = dma.hbm_to_vmem [thread:$0]  %s7, 4096, %s67, [#allocation9], 128, 128, 8
    $region33: #{moco_forward.2} parent=1 // pred_fallthru
      _
    // Predicated region
    $region34: #{moco_forward.2} parent=1 // pred_check
      _
    $region35: #{moco_forward.2} parent=1 // pred_check_branch
      %74 = sbr.rel (0) target = $region37
    $region36: #{moco_forward.2} parent=1 // pred_region
      %75 = dma.done [#allocation3], 16
    $region37: #{moco_forward.2} parent=1 // pred_fallthru
      _
    // Predicated region
    $region38: #{moco_forward.2} parent=1 // pred_check
      _
    $region39: #{moco_forward.2} parent=1 // pred_check_branch
      %77 = sbr.rel (0) target = $region41
    $region40: #{moco_forward.2} parent=1 // pred_region
      %78 = dma.done [#allocation6], 256
    $region41: #{moco_forward.2} parent=1 // pred_fallthru
      _
    // Predicated region
    $region42: #{moco_forward.2} parent=1 // pred_check
      _
    $region43: #{moco_forward.2} parent=1 // pred_check_branch
      %80 = sbr.rel (0) target = $region45
    $region44: #{moco_forward.2} parent=1 // pred_region
      %81 = dma.done [#allocation6], 4096
    $region45: #{moco_forward.2} parent=1 // pred_fallthru
      _
    // Predicated region
    $region46: #{moco_forward.2} parent=1 // pred_check
      _
    $region47: #{moco_forward.2} parent=1 // pred_check_branch
      %83 = sbr.rel (0) target = $region49
    $region48: #{moco_forward.2} parent=1 // pred_region
      %84 = dma.done [#allocation9], 4096
    $region49: #{moco_forward.2} parent=1 // pred_fallthru
      _
    %v85 = vld [vmem:[%s4] sm:$0x3]
    %v86 = vmul.f32 %v85, 0.99
    %v87 = vld [vmem:[%s0] sm:$0x3]
    %v88 = vmul.f32 %v87, 0.01
    %v89 = vadd.f32 %v86, %v88
    %v90 = vlaneseq
    %vm91 = vcmp.ge.s32.totalorder %v90, 0
    %vm92 = vcmp.lt.s32.totalorder %v90, 256
    %vm93 = vmand %vm91, %vm92
    %94 = vst.msk [vmem:[%s8] sm:$0x3] %vm93, %v89
    %v95 = vld [vmem:[%s5] sm:$0x1]
    %v96 = vmul.f32 %v95, 0.99
    %v97 = vld [vmem:[#allocation2] sm:$0x1]
    %v98 = vmul.f32 %v97, 0.01
    %v99 = vadd.f32 %v96, %v98
    %100 = vst [vmem:[%s9] sm:$0x1] %v99
    %v101 = vld [vmem:[%s6] sm:$0xff]
    %v102 = vld [vmem:[%s6 + $0x8] sm:$0xff]
    %v103 = vmul.f32 %v101, 0.99
    %v104 = vmul.f32 %v102, 0.99
    %v105 = vld [vmem:[#allocation5] sm:$0xff]
    %v106 = vld [vmem:[#allocation5 + $0x8] sm:$0xff]
    %v107 = vmul.f32 %v105, 0.01
    %v108 = vmul.f32 %v106, 0.01
    %v109 = vadd.f32 %v103, %v107
    %v110 = vadd.f32 %v104, %v108
    %111 = vst [vmem:[%s10] sm:$0xff] %v109
    %112 = vst [vmem:[%s10 + $0x8] sm:$0xff] %v110
    %v113 = vld [vmem:[#allocation8] sm:$0xff]
    %v114 = vld [vmem:[#allocation8 + $0x8] sm:$0xff]
    %v115 = vld [vmem:[#allocation8 + $0x10] sm:$0xff]
    %v116 = vld [vmem:[#allocation8 + $0x18] sm:$0xff]
    %v117 = vld [vmem:[#allocation8 + $0x20] sm:$0xff]
    %v118 = vld [vmem:[#allocation8 + $0x28] sm:$0xff]
    %v119 = vld [vmem:[#allocation8 + $0x30] sm:$0xff]
    %v120 = vld [vmem:[#allocation8 + $0x38] sm:$0xff]
    %v121 = vld [vmem:[#allocation8 + $0x40] sm:$0xff]
    %v122 = vld [vmem:[#allocation8 + $0x48] sm:$0xff]
    %v123 = vld [vmem:[#allocation8 + $0x50] sm:$0xff]
    %v124 = vld [vmem:[#allocation8 + $0x58] sm:$0xff]
    %v125 = vld [vmem:[#allocation8 + $0x60] sm:$0xff]
    %v126 = vld [vmem:[#allocation8 + $0x68] sm:$0xff]
    %v127 = vld [vmem:[#allocation8 + $0x70] sm:$0xff]
    %v128 = vld [vmem:[#allocation8 + $0x78] sm:$0xff]
    %v129 = vld [vmem:[#allocation8 + $0x80] sm:$0xff]
    %v130 = vld [vmem:[#allocation8 + $0x88] sm:$0xff]
    %v131 = vld [vmem:[#allocation8 + $0x90] sm:$0xff]
    %v132 = vld [vmem:[#allocation8 + $0x98] sm:$0xff]
    %v133 = vld [vmem:[#allocation8 + $0xa0] sm:$0xff]
    %v134 = vld [vmem:[#allocation8 + $0xa8] sm:$0xff]
    %v135 = vld [vmem:[#allocation8 + $0xb0] sm:$0xff]
    %v136 = vld [vmem:[#allocation8 + $0xb8] sm:$0xff]
    %v137 = vld [vmem:[#allocation8 + $0xc0] sm:$0xff]
    %v138 = vld [vmem:[#allocation8 + $0xc8] sm:$0xff]
    %v139 = vld [vmem:[#allocation8 + $0xd0] sm:$0xff]
    %v140 = vld [vmem:[#allocation8 + $0xd8] sm:$0xff]
    %v141 = vld [vmem:[#allocation8 + $0xe0] sm:$0xff]
    %v142 = vld [vmem:[#allocation8 + $0xe8] sm:$0xff]
    %v143 = vld [vmem:[#allocation8 + $0xf0] sm:$0xff]
    %v144 = vld [vmem:[#allocation8 + $0xf8] sm:$0xff]
    %v145 = vmul.f32 %v113, 0.99
    %v146 = vmul.f32 %v114, 0.99
    %v147 = vmul.f32 %v115, 0.99
    %v148 = vmul.f32 %v116, 0.99
    %v149 = vmul.f32 %v117, 0.99
    %v150 = vmul.f32 %v118, 0.99
    %v151 = vmul.f32 %v119, 0.99
    %v152 = vmul.f32 %v120, 0.99
    %v153 = vmul.f32 %v121, 0.99
    %v154 = vmul.f32 %v122, 0.99
    %v155 = vmul.f32 %v123, 0.99
    %v156 = vmul.f32 %v124, 0.99
    %v157 = vmul.f32 %v125, 0.99
    %v158 = vmul.f32 %v126, 0.99
    %v159 = vmul.f32 %v127, 0.99
    %v160 = vmul.f32 %v128, 0.99
    %v161 = vmul.f32 %v129, 0.99
    %v162 = vmul.f32 %v130, 0.99
    %v163 = vmul.f32 %v131, 0.99
    %v164 = vmul.f32 %v132, 0.99
    %v165 = vmul.f32 %v133, 0.99
    %v166 = vmul.f32 %v134, 0.99
    %v167 = vmul.f32 %v135, 0.99
    %v168 = vmul.f32 %v136, 0.99
    %v169 = vmul.f32 %v137, 0.99
    %v170 = vmul.f32 %v138, 0.99
    %v171 = vmul.f32 %v139, 0.99
    %v172 = vmul.f32 %v140, 0.99
    %v173 = vmul.f32 %v141, 0.99
    %v174 = vmul.f32 %v142, 0.99
    %v175 = vmul.f32 %v143, 0.99
    %v176 = vmul.f32 %v144, 0.99
    %v177 = vld [vmem:[#allocation7] sm:$0xff]
    %v178 = vld [vmem:[#allocation7 + $0x8] sm:$0xff]
    %v179 = vld [vmem:[#allocation7 + $0x10] sm:$0xff]
    %v180 = vld [vmem:[#allocation7 + $0x18] sm:$0xff]
    %v181 = vld [vmem:[#allocation7 + $0x20] sm:$0xff]
    %v182 = vld [vmem:[#allocation7 + $0x28] sm:$0xff]
    %v183 = vld [vmem:[#allocation7 + $0x30] sm:$0xff]
    %v184 = vld [vmem:[#allocation7 + $0x38] sm:$0xff]
    %v185 = vld [vmem:[#allocation7 + $0x40] sm:$0xff]
    %v186 = vld [vmem:[#allocation7 + $0x48] sm:$0xff]
    %v187 = vld [vmem:[#allocation7 + $0x50] sm:$0xff]
    %v188 = vld [vmem:[#allocation7 + $0x58] sm:$0xff]
    %v189 = vld [vmem:[#allocation7 + $0x60] sm:$0xff]
    %v190 = vld [vmem:[#allocation7 + $0x68] sm:$0xff]
    %v191 = vld [vmem:[#allocation7 + $0x70] sm:$0xff]
    %v192 = vld [vmem:[#allocation7 + $0x78] sm:$0xff]
    %v193 = vld [vmem:[#allocation7 + $0x80] sm:$0xff]
    %v194 = vld [vmem:[#allocation7 + $0x88] sm:$0xff]
    %v195 = vld [vmem:[#allocation7 + $0x90] sm:$0xff]
    %v196 = vld [vmem:[#allocation7 + $0x98] sm:$0xff]
    %v197 = vld [vmem:[#allocation7 + $0xa0] sm:$0xff]
    %v198 = vld [vmem:[#allocation7 + $0xa8] sm:$0xff]
    %v199 = vld [vmem:[#allocation7 + $0xb0] sm:$0xff]
    %v200 = vld [vmem:[#allocation7 + $0xb8] sm:$0xff]
    %v201 = vld [vmem:[#allocation7 + $0xc0] sm:$0xff]
    %v202 = vld [vmem:[#allocation7 + $0xc8] sm:$0xff]
    %v203 = vld [vmem:[#allocation7 + $0xd0] sm:$0xff]
    %v204 = vld [vmem:[#allocation7 + $0xd8] sm:$0xff]
    %v205 = vld [vmem:[#allocation7 + $0xe0] sm:$0xff]
    %v206 = vld [vmem:[#allocation7 + $0xe8] sm:$0xff]
    %v207 = vld [vmem:[#allocation7 + $0xf0] sm:$0xff]
    %v208 = vld [vmem:[#allocation7 + $0xf8] sm:$0xff]
    %v209 = vmul.f32 %v177, 0.01
    %v210 = vmul.f32 %v178, 0.01
    %v211 = vmul.f32 %v179, 0.01
    %v212 = vmul.f32 %v180, 0.01
    %v213 = vmul.f32 %v181, 0.01
    %v214 = vmul.f32 %v182, 0.01
    %v215 = vmul.f32 %v183, 0.01
    %v216 = vmul.f32 %v184, 0.01
    %v217 = vmul.f32 %v185, 0.01
    %v218 = vmul.f32 %v186, 0.01
    %v219 = vmul.f32 %v187, 0.01
    %v220 = vmul.f32 %v188, 0.01
    %v221 = vmul.f32 %v189, 0.01
    %v222 = vmul.f32 %v190, 0.01
    %v223 = vmul.f32 %v191, 0.01
    %v224 = vmul.f32 %v192, 0.01
    %v225 = vmul.f32 %v193, 0.01
    %v226 = vmul.f32 %v194, 0.01
    %v227 = vmul.f32 %v195, 0.01
    %v228 = vmul.f32 %v196, 0.01
    %v229 = vmul.f32 %v197, 0.01
    %v230 = vmul.f32 %v198, 0.01
    %v231 = vmul.f32 %v199, 0.01
    %v232 = vmul.f32 %v200, 0.01
    %v233 = vmul.f32 %v201, 0.01
    %v234 = vmul.f32 %v202, 0.01
    %v235 = vmul.f32 %v203, 0.01
    %v236 = vmul.f32 %v204, 0.01
    %v237 = vmul.f32 %v205, 0.01
    %v238 = vmul.f32 %v206, 0.01
    %v239 = vmul.f32 %v207, 0.01
    %v240 = vmul.f32 %v208, 0.01
    %v241 = vadd.f32 %v145, %v209
    %v242 = vadd.f32 %v146, %v210
    %v243 = vadd.f32 %v147, %v211
    %v244 = vadd.f32 %v148, %v212
    %v245 = vadd.f32 %v149, %v213
    %v246 = vadd.f32 %v150, %v214
    %v247 = vadd.f32 %v151, %v215
    %v248 = vadd.f32 %v152, %v216
    %v249 = vadd.f32 %v153, %v217
    %v250 = vadd.f32 %v154, %v218
    %v251 = vadd.f32 %v155, %v219
    %v252 = vadd.f32 %v156, %v220
    %v253 = vadd.f32 %v157, %v221
    %v254 = vadd.f32 %v158, %v222
    %v255 = vadd.f32 %v159, %v223
    %v256 = vadd.f32 %v160, %v224
    %v257 = vadd.f32 %v161, %v225
    %v258 = vadd.f32 %v162, %v226
    %v259 = vadd.f32 %v163, %v227
    %v260 = vadd.f32 %v164, %v228
    %v261 = vadd.f32 %v165, %v229
    %v262 = vadd.f32 %v166, %v230
    %v263 = vadd.f32 %v167, %v231
    %v264 = vadd.f32 %v168, %v232
    %v265 = vadd.f32 %v169, %v233
    %v266 = vadd.f32 %v170, %v234
    %v267 = vadd.f32 %v171, %v235
    %v268 = vadd.f32 %v172, %v236
    %v269 = vadd.f32 %v173, %v237
    %v270 = vadd.f32 %v174, %v238
    %v271 = vadd.f32 %v175, %v239
    %v272 = vadd.f32 %v176, %v240
    %273 = vst [vmem:[#allocation10] sm:$0xff] %v241
    %274 = vst [vmem:[#allocation10 + $0x8] sm:$0xff] %v242
    %275 = vst [vmem:[#allocation10 + $0x10] sm:$0xff] %v243
    %276 = vst [vmem:[#allocation10 + $0x18] sm:$0xff] %v244
    %277 = vst [vmem:[#allocation10 + $0x20] sm:$0xff] %v245
    %278 = vst [vmem:[#allocation10 + $0x28] sm:$0xff] %v246
    %279 = vst [vmem:[#allocation10 + $0x30] sm:$0xff] %v247
    %280 = vst [vmem:[#allocation10 + $0x38] sm:$0xff] %v248
    %281 = vst [vmem:[#allocation10 + $0x40] sm:$0xff] %v249
    %282 = vst [vmem:[#allocation10 + $0x48] sm:$0xff] %v250
    %283 = vst [vmem:[#allocation10 + $0x50] sm:$0xff] %v251
    %284 = vst [vmem:[#allocation10 + $0x58] sm:$0xff] %v252
    %285 = vst [vmem:[#allocation10 + $0x60] sm:$0xff] %v253
    %286 = vst [vmem:[#allocation10 + $0x68] sm:$0xff] %v254
    %287 = vst [vmem:[#allocation10 + $0x70] sm:$0xff] %v255
    %288 = vst [vmem:[#allocation10 + $0x78] sm:$0xff] %v256
    %289 = vst [vmem:[#allocation10 + $0x80] sm:$0xff] %v257
    %290 = vst [vmem:[#allocation10 + $0x88] sm:$0xff] %v258
    %291 = vst [vmem:[#allocation10 + $0x90] sm:$0xff] %v259
    %292 = vst [vmem:[#allocation10 + $0x98] sm:$0xff] %v260
    %293 = vst [vmem:[#allocation10 + $0xa0] sm:$0xff] %v261
    %294 = vst [vmem:[#allocation10 + $0xa8] sm:$0xff] %v262
    %295 = vst [vmem:[#allocation10 + $0xb0] sm:$0xff] %v263
    %296 = vst [vmem:[#allocation10 + $0xb8] sm:$0xff] %v264
    %297 = vst [vmem:[#allocation10 + $0xc0] sm:$0xff] %v265
    %298 = vst [vmem:[#allocation10 + $0xc8] sm:$0xff] %v266
    %299 = vst [vmem:[#allocation10 + $0xd0] sm:$0xff] %v267
    %300 = vst [vmem:[#allocation10 + $0xd8] sm:$0xff] %v268
    %301 = vst [vmem:[#allocation10 + $0xe0] sm:$0xff] %v269
    %302 = vst [vmem:[#allocation10 + $0xe8] sm:$0xff] %v270
    %303 = vst [vmem:[#allocation10 + $0xf0] sm:$0xff] %v271
    %304 = vst [vmem:[#allocation10 + $0xf8] sm:$0xff] %v272
    // Predicated region
    $region50: #{moco_forward.2} parent=1 // pred_check
      _
    $region51: #{moco_forward.2} parent=1 // pred_check_branch
      %306 = sbr.rel (0) target = $region53
    $region52: #{moco_forward.2} parent=1 // pred_region
      _
    $region53: #{moco_forward.2} parent=1 // pred_fallthru
      _
    // Predicated region
    $region54: #{moco_forward.2} parent=1 // pred_check
      _
    $region55: #{moco_forward.2} parent=1 // pred_check_branch
      %308 = sbr.rel (0) target = $region57
    $region56: #{moco_forward.2} parent=1 // pred_region
      _
    $region57: #{moco_forward.2} parent=1 // pred_fallthru
      _
    // Predicated region
    $region58: #{moco_forward.2} parent=1 // pred_check
      _
    $region59: #{moco_forward.2} parent=1 // pred_check_branch
      %310 = sbr.rel (0) target = $region61
    $region60: #{moco_forward.2} parent=1 // pred_region
      _
    $region61: #{moco_forward.2} parent=1 // pred_fallthru
      _
    // Predicated region
    $region62: #{moco_forward.2} parent=1 // pred_check
      _
    $region63: #{moco_forward.2} parent=1 // pred_check_branch
      %312 = sbr.rel (0) target = $region65
    $region64: #{moco_forward.2} parent=1 // pred_region
      %s314 = ssub.s32 4096, 4096
      %315 = vsyncadd [#allocation4], %s314
      %s316 = sshll.u32 [#allocation10], 4
      %s317 = int_to_ptr.vmem [resolvable:$true] %s316
      %322 = dma.vmem_to_hbm [thread:$0]  %s317, 4096, %s11, [#allocation4], 128, 128, 8
    $region65: #{moco_forward.2} parent=1 // pred_fallthru
      _
    // Predicated region
    $region66: #{moco_forward.2} parent=1 // pred_check
      _
    $region67: #{moco_forward.2} parent=1 // pred_check_branch
      %324 = sbr.rel (0) target = $region69
    $region68: #{moco_forward.2} parent=1 // pred_region
      _
    $region69: #{moco_forward.2} parent=1 // pred_fallthru
      _
    // Predicated region
    $region70: #{moco_forward.2} parent=1 // pred_check
      _
    $region71: #{moco_forward.2} parent=1 // pred_check_branch
      %326 = sbr.rel (0) target = $region73
    $region72: #{moco_forward.2} parent=1 // pred_region
      _
    $region73: #{moco_forward.2} parent=1 // pred_fallthru
      _
    // Predicated region
    $region74: #{moco_forward.2} parent=1 // pred_check
      _
    $region75: #{moco_forward.2} parent=1 // pred_check_branch
      %328 = sbr.rel (0) target = $region77
    $region76: #{moco_forward.2} parent=1 // pred_region
      _
    $region77: #{moco_forward.2} parent=1 // pred_fallthru
      _
    // Predicated region
    $region78: #{moco_forward.2} parent=1 // pred_check
      _
    $region79: #{moco_forward.2} parent=1 // pred_check_branch
      %330 = sbr.rel (0) target = $region81
    $region80: #{moco_forward.2} parent=1 // pred_region
      %331 = dma.done [#allocation4], 4096
    $region81: #{moco_forward.2} parent=1 // pred_fallthru
      _
    %332 = vsyncpa [#allocation3], 1
    %333 = vsyncpa [#allocation6], 1
    %334 = vsyncpa [#allocation9], 1
    %335 = vsyncpa [#allocation4], 1

// kernel: moco_forward.3
$region0: #{moco_forward.3}
  #allocation0 [shape = 'u32[]', space=smem, size = 0x4, offset = 0x4, fixed_abs, tag = 'smem constant byte address 0x4 - core index']
  #allocation1 [shape = 'u32[144,128]{1,0:T(1,128)}', space=vmem, size = 0x12000, scoped, tag = 'internal scratch']
  %s0 = inlined_call_operand.vmem [shape: f32[2,8,8,256], index: 0, kind: input, shape index: {}, may-alias: {0,1}]
  %s1 = inlined_call_operand.vmem [shape: f32[2,8,8,256], index: 1, kind: input, shape index: {}, may-alias: {0,1}]
  %s2 = inlined_call_operand.vmem [shape: bf16[8,256], index: 2, kind: input, shape index: {}]
  %s3 = inlined_call_operand.vmem [shape: f32[1,256], index: 3, kind: input, shape index: {}]
  %s4 = inlined_call_operand.vmem [shape: bf16[256,128], index: 4, kind: input, shape index: {}]
  %s5 = inlined_call_operand.vmem [shape: f32[1,128], index: 5, kind: input, shape index: {}]
  %s6 = inlined_call_operand.vmem [shape: bf16[8,256], index: 6, kind: input, shape index: {}]
  %s7 = inlined_call_operand.vmem [shape: f32[1,256], index: 7, kind: input, shape index: {}]
  %s8 = inlined_call_operand.vmem [shape: bf16[256,128], index: 8, kind: input, shape index: {}]
  %s9 = inlined_call_operand.vmem [shape: f32[1,128], index: 9, kind: input, shape index: {}]
  %s10 = inlined_call_operand.vmem [shape: bf16[128,256], index: 10, kind: input, shape index: {}]
  %s11 = inlined_call_operand.vmem [shape: f32[1,256], index: 11, kind: input, shape index: {}]
  %s12 = inlined_call_operand.vmem [shape: f32[1,256], index: 12, kind: input, shape index: {}]
  %s13 = inlined_call_operand.vmem [shape: bf16[256,128], index: 13, kind: input, shape index: {}]
  %s14 = inlined_call_operand.vmem [shape: f32[2,8,128], index: 14, kind: output, shape index: {}]
  %s15 = sld [smem:[#allocation0]]
  $region89: #{moco_forward.3} parent=0
    _
  %s17 = ssub.s32 1, %s15
  %s18 = scalar_select 0, %s17, %s15
  loop: start=0, step=1, limit=4
  $region2: #{moco_forward.3} parent=0 // loop_pre_header
    _
  $region3: #{moco_forward.3} parent=0 // loop_header
    %s20 = sphi 0, %s24
    %p21 = scmp.ge.s32.totalorder %s20, 4
    %s30 = sphi 0, %s32
    %s33 = sphi 0, %s30
    %s34 = sphi 0, %s33
    %s50 = sphi 0, %s34
    %s58 = sphi 0, %s60
    %s61 = sphi 0, %s58
    %s62 = sphi 0, %s61
    %s78 = sphi 0, %s62
    %s82 = sphi 0, %s82
    %s84 = sphi 0, %s82
    %s85 = sphi 0, %s84
    %s99 = sphi 0, %s85
    %s103 = sphi 0, %s103
    %s105 = sphi 0, %s103
    %s106 = sphi 0, %s105
    %s120 = sphi 0, %s106
    %s124 = sphi 0, %s124
    %s126 = sphi 0, %s124
    %s127 = sphi 0, %s126
    %s141 = sphi 0, %s127
    %s145 = sphi 0, %s145
    %s147 = sphi 0, %s145
    %s148 = sphi 0, %s147
    %s162 = sphi 0, %s148
    %s166 = sphi 0, %s166
    %s168 = sphi 0, %s166
    %s169 = sphi 0, %s168
    %s183 = sphi 0, %s169
    %s187 = sphi 0, %s187
    %s189 = sphi 0, %s187
    %s190 = sphi 0, %s189
    %s204 = sphi 0, %s190
    %s208 = sphi 0, %s208
    %s210 = sphi 0, %s208
    %s211 = sphi 0, %s210
    %s225 = sphi 0, %s211
    %s229 = sphi 0, %s229
    %s231 = sphi 0, %s229
    %s232 = sphi 0, %s231
    %s246 = sphi 0, %s232
    %s250 = sphi 0, %s250
    %s252 = sphi 0, %s250
    %s253 = sphi 0, %s252
    %s267 = sphi 0, %s253
    %s271 = sphi 0, %s271
    %s273 = sphi 0, %s271
    %s274 = sphi 0, %s273
    %s288 = sphi 0, %s274
    %s292 = sphi 0, %s292
    %s294 = sphi 0, %s292
    %s295 = sphi 0, %s294
    %s309 = sphi 0, %s295
    %s313 = sphi 0, %s313
    %s315 = sphi 0, %s313
    %s316 = sphi 0, %s315
    %s330 = sphi 0, %s316
    %s336 = sphi 0, %s338
    %s339 = sphi 0, %s336
    %s340 = sphi 0, %s339
    %s356 = sphi 0, %s340
  $region4: #{moco_forward.3} parent=0 // loop_header_branch
    %23 = sbr.rel (%p21) target = $region8
  $region5: #{moco_forward.3} parent=0 // loop_body
    %s25 = ssub.s32 %s20, 1
    %s26 = ssub.s32 %s20, 2
    %s27 = sadd.s32 %s20, 1
    %s28 = ssub.s32 %s20, %s27
    %p29 = scmp.eq.s32.totalorder %s28, 0
    %s31 = sadd.s32 %s30, 1
    %s32 = scalar_select %p29, %s30, %s31
    %p35 = pneg %p29
    %p36 = scmp.eq.s32.totalorder %s20, 1
    %p37 = por %p35, %p36
    %p38 = scmp.ne.s32.totalorder %s30, %s33
    %p39 = scmp.eq.s32.totalorder %s20, 0
    %p40 = por %p38, %p39
    %p41 = scmp.ne.s32.totalorder %s30, %s33
    %p42 = scmp.eq.s32.totalorder %s25, 1
    %p43 = por %p41, %p42
    %p44 = scmp.ne.s32.totalorder %s33, %s34
    %p45 = scmp.eq.s32.totalorder %s25, 0
    %p46 = por %p44, %p45
    %p47 = scmp.ne.s32.totalorder %s33, %s34
    %p48 = scmp.eq.s32.totalorder %s26, 1
    %p49 = por %p47, %p48
    %p51 = scmp.ne.s32.totalorder %s34, %s50
    %p52 = scmp.eq.s32.totalorder %s26, 0
    %p53 = por %p51, %p52
    %s54 = ssub.s32 1, %s20
    %s55 = ssub.s32 1, %s27
    %s56 = ssub.s32 %s54, %s55
    %p57 = scmp.eq.s32.totalorder %s56, 0
    %s59 = sadd.s32 %s58, 1
    %s60 = scalar_select %p57, %s58, %s59
    %p63 = pneg %p57
    %p64 = scmp.eq.s32.totalorder %s20, 1
    %p65 = por %p63, %p64
    %p66 = scmp.ne.s32.totalorder %s58, %s61
    %p67 = scmp.eq.s32.totalorder %s20, 0
    %p68 = por %p66, %p67
    %p69 = scmp.ne.s32.totalorder %s58, %s61
    %p70 = scmp.eq.s32.totalorder %s25, 1
    %p71 = por %p69, %p70
    %p72 = scmp.ne.s32.totalorder %s61, %s62
    %p73 = scmp.eq.s32.totalorder %s25, 0
    %p74 = por %p72, %p73
    %p75 = scmp.ne.s32.totalorder %s61, %s62
    %p76 = scmp.eq.s32.totalorder %s26, 1
    %p77 = por %p75, %p76
    %p79 = scmp.ne.s32.totalorder %s62, %s78
    %p80 = scmp.eq.s32.totalorder %s26, 0
    %p81 = por %p79, %p80
    %s83 = sadd.s32 %s82, 1
    %p86 = scmp.eq.s32.totalorder %s20, 1
    %p87 = scmp.ne.s32.totalorder %s82, %s84
    %p88 = scmp.eq.s32.totalorder %s20, 0
    %p89 = por %p87, %p88
    %p90 = scmp.ne.s32.totalorder %s82, %s84
    %p91 = scmp.eq.s32.totalorder %s25, 1
    %p92 = por %p90, %p91
    %p93 = scmp.ne.s32.totalorder %s84, %s85
    %p94 = scmp.eq.s32.totalorder %s25, 0
    %p95 = por %p93, %p94
    %p96 = scmp.ne.s32.totalorder %s84, %s85
    %p97 = scmp.eq.s32.totalorder %s26, 1
    %p98 = por %p96, %p97
    %p100 = scmp.ne.s32.totalorder %s85, %s99
    %p101 = scmp.eq.s32.totalorder %s26, 0
    %p102 = por %p100, %p101
    %s104 = sadd.s32 %s103, 1
    %p107 = scmp.eq.s32.totalorder %s20, 1
    %p108 = scmp.ne.s32.totalorder %s103, %s105
    %p109 = scmp.eq.s32.totalorder %s20, 0
    %p110 = por %p108, %p109
    %p111 = scmp.ne.s32.totalorder %s103, %s105
    %p112 = scmp.eq.s32.totalorder %s25, 1
    %p113 = por %p111, %p112
    %p114 = scmp.ne.s32.totalorder %s105, %s106
    %p115 = scmp.eq.s32.totalorder %s25, 0
    %p116 = por %p114, %p115
    %p117 = scmp.ne.s32.totalorder %s105, %s106
    %p118 = scmp.eq.s32.totalorder %s26, 1
    %p119 = por %p117, %p118
    %p121 = scmp.ne.s32.totalorder %s106, %s120
    %p122 = scmp.eq.s32.totalorder %s26, 0
    %p123 = por %p121, %p122
    %s125 = sadd.s32 %s124, 1
    %p128 = scmp.eq.s32.totalorder %s20, 1
    %p129 = scmp.ne.s32.totalorder %s124, %s126
    %p130 = scmp.eq.s32.totalorder %s20, 0
    %p131 = por %p129, %p130
    %p132 = scmp.ne.s32.totalorder %s124, %s126
    %p133 = scmp.eq.s32.totalorder %s25, 1
    %p134 = por %p132, %p133
    %p135 = scmp.ne.s32.totalorder %s126, %s127
    %p136 = scmp.eq.s32.totalorder %s25, 0
    %p137 = por %p135, %p136
    %p138 = scmp.ne.s32.totalorder %s126, %s127
    %p139 = scmp.eq.s32.totalorder %s26, 1
    %p140 = por %p138, %p139
    %p142 = scmp.ne.s32.totalorder %s127, %s141
    %p143 = scmp.eq.s32.totalorder %s26, 0
    %p144 = por %p142, %p143
    %s146 = sadd.s32 %s145, 1
    %p149 = scmp.eq.s32.totalorder %s20, 1
    %p150 = scmp.ne.s32.totalorder %s145, %s147
    %p151 = scmp.eq.s32.totalorder %s20, 0
    %p152 = por %p150, %p151
    %p153 = scmp.ne.s32.totalorder %s145, %s147
    %p154 = scmp.eq.s32.totalorder %s25, 1
    %p155 = por %p153, %p154
    %p156 = scmp.ne.s32.totalorder %s147, %s148
    %p157 = scmp.eq.s32.totalorder %s25, 0
    %p158 = por %p156, %p157
    %p159 = scmp.ne.s32.totalorder %s147, %s148
    %p160 = scmp.eq.s32.totalorder %s26, 1
    %p161 = por %p159, %p160
    %p163 = scmp.ne.s32.totalorder %s148, %s162
    %p164 = scmp.eq.s32.totalorder %s26, 0
    %p165 = por %p163, %p164
    %s167 = sadd.s32 %s166, 1
    %p170 = scmp.eq.s32.totalorder %s20, 1
    %p171 = scmp.ne.s32.totalorder %s166, %s168
    %p172 = scmp.eq.s32.totalorder %s20, 0
    %p173 = por %p171, %p172
    %p174 = scmp.ne.s32.totalorder %s166, %s168
    %p175 = scmp.eq.s32.totalorder %s25, 1
    %p176 = por %p174, %p175
    %p177 = scmp.ne.s32.totalorder %s168, %s169
    %p178 = scmp.eq.s32.totalorder %s25, 0
    %p179 = por %p177, %p178
    %p180 = scmp.ne.s32.totalorder %s168, %s169
    %p181 = scmp.eq.s32.totalorder %s26, 1
    %p182 = por %p180, %p181
    %p184 = scmp.ne.s32.totalorder %s169, %s183
    %p185 = scmp.eq.s32.totalorder %s26, 0
    %p186 = por %p184, %p185
    %s188 = sadd.s32 %s187, 1
    %p191 = scmp.eq.s32.totalorder %s20, 1
    %p192 = scmp.ne.s32.totalorder %s187, %s189
    %p193 = scmp.eq.s32.totalorder %s20, 0
    %p194 = por %p192, %p193
    %p195 = scmp.ne.s32.totalorder %s187, %s189
    %p196 = scmp.eq.s32.totalorder %s25, 1
    %p197 = por %p195, %p196
    %p198 = scmp.ne.s32.totalorder %s189, %s190
    %p199 = scmp.eq.s32.totalorder %s25, 0
    %p200 = por %p198, %p199
    %p201 = scmp.ne.s32.totalorder %s189, %s190
    %p202 = scmp.eq.s32.totalorder %s26, 1
    %p203 = por %p201, %p202
    %p205 = scmp.ne.s32.totalorder %s190, %s204
    %p206 = scmp.eq.s32.totalorder %s26, 0
    %p207 = por %p205, %p206
    %s209 = sadd.s32 %s208, 1
    %p212 = scmp.eq.s32.totalorder %s20, 1
    %p213 = scmp.ne.s32.totalorder %s208, %s210
    %p214 = scmp.eq.s32.totalorder %s20, 0
    %p215 = por %p213, %p214
    %p216 = scmp.ne.s32.totalorder %s208, %s210
    %p217 = scmp.eq.s32.totalorder %s25, 1
    %p218 = por %p216, %p217
    %p219 = scmp.ne.s32.totalorder %s210, %s211
    %p220 = scmp.eq.s32.totalorder %s25, 0
    %p221 = por %p219, %p220
    %p222 = scmp.ne.s32.totalorder %s210, %s211
    %p223 = scmp.eq.s32.totalorder %s26, 1
    %p224 = por %p222, %p223
    %p226 = scmp.ne.s32.totalorder %s211, %s225
    %p227 = scmp.eq.s32.totalorder %s26, 0
    %p228 = por %p226, %p227
    %s230 = sadd.s32 %s229, 1
    %p233 = scmp.eq.s32.totalorder %s20, 1
    %p234 = scmp.ne.s32.totalorder %s229, %s231
    %p235 = scmp.eq.s32.totalorder %s20, 0
    %p236 = por %p234, %p235
    %p237 = scmp.ne.s32.totalorder %s229, %s231
    %p238 = scmp.eq.s32.totalorder %s25, 1
    %p239 = por %p237, %p238
    %p240 = scmp.ne.s32.totalorder %s231, %s232
    %p241 = scmp.eq.s32.totalorder %s25, 0
    %p242 = por %p240, %p241
    %p243 = scmp.ne.s32.totalorder %s231, %s232
    %p244 = scmp.eq.s32.totalorder %s26, 1
    %p245 = por %p243, %p244
    %p247 = scmp.ne.s32.totalorder %s232, %s246
    %p248 = scmp.eq.s32.totalorder %s26, 0
    %p249 = por %p247, %p248
    %s251 = sadd.s32 %s250, 1
    %p254 = scmp.eq.s32.totalorder %s20, 1
    %p255 = scmp.ne.s32.totalorder %s250, %s252
    %p256 = scmp.eq.s32.totalorder %s20, 0
    %p257 = por %p255, %p256
    %p258 = scmp.ne.s32.totalorder %s250, %s252
    %p259 = scmp.eq.s32.totalorder %s25, 1
    %p260 = por %p258, %p259
    %p261 = scmp.ne.s32.totalorder %s252, %s253
    %p262 = scmp.eq.s32.totalorder %s25, 0
    %p263 = por %p261, %p262
    %p264 = scmp.ne.s32.totalorder %s252, %s253
    %p265 = scmp.eq.s32.totalorder %s26, 1
    %p266 = por %p264, %p265
    %p268 = scmp.ne.s32.totalorder %s253, %s267
    %p269 = scmp.eq.s32.totalorder %s26, 0
    %p270 = por %p268, %p269
    %s272 = sadd.s32 %s271, 1
    %p275 = scmp.eq.s32.totalorder %s20, 1
    %p276 = scmp.ne.s32.totalorder %s271, %s273
    %p277 = scmp.eq.s32.totalorder %s20, 0
    %p278 = por %p276, %p277
    %p279 = scmp.ne.s32.totalorder %s271, %s273
    %p280 = scmp.eq.s32.totalorder %s25, 1
    %p281 = por %p279, %p280
    %p282 = scmp.ne.s32.totalorder %s273, %s274
    %p283 = scmp.eq.s32.totalorder %s25, 0
    %p284 = por %p282, %p283
    %p285 = scmp.ne.s32.totalorder %s273, %s274
    %p286 = scmp.eq.s32.totalorder %s26, 1
    %p287 = por %p285, %p286
    %p289 = scmp.ne.s32.totalorder %s274, %s288
    %p290 = scmp.eq.s32.totalorder %s26, 0
    %p291 = por %p289, %p290
    %s293 = sadd.s32 %s292, 1
    %p296 = scmp.eq.s32.totalorder %s20, 1
    %p297 = scmp.ne.s32.totalorder %s292, %s294
    %p298 = scmp.eq.s32.totalorder %s20, 0
    %p299 = por %p297, %p298
    %p300 = scmp.ne.s32.totalorder %s292, %s294
    %p301 = scmp.eq.s32.totalorder %s25, 1
    %p302 = por %p300, %p301
    %p303 = scmp.ne.s32.totalorder %s294, %s295
    %p304 = scmp.eq.s32.totalorder %s25, 0
    %p305 = por %p303, %p304
    %p306 = scmp.ne.s32.totalorder %s294, %s295
    %p307 = scmp.eq.s32.totalorder %s26, 1
    %p308 = por %p306, %p307
    %p310 = scmp.ne.s32.totalorder %s295, %s309
    %p311 = scmp.eq.s32.totalorder %s26, 0
    %p312 = por %p310, %p311
    %s314 = sadd.s32 %s313, 1
    %p317 = scmp.eq.s32.totalorder %s20, 1
    %p318 = scmp.ne.s32.totalorder %s313, %s315
    %p319 = scmp.eq.s32.totalorder %s20, 0
    %p320 = por %p318, %p319
    %p321 = scmp.ne.s32.totalorder %s313, %s315
    %p322 = scmp.eq.s32.totalorder %s25, 1
    %p323 = por %p321, %p322
    %p324 = scmp.ne.s32.totalorder %s315, %s316
    %p325 = scmp.eq.s32.totalorder %s25, 0
    %p326 = por %p324, %p325
    %p327 = scmp.ne.s32.totalorder %s315, %s316
    %p328 = scmp.eq.s32.totalorder %s26, 1
    %p329 = por %p327, %p328
    %p331 = scmp.ne.s32.totalorder %s316, %s330
    %p332 = scmp.eq.s32.totalorder %s26, 0
    %p333 = por %p331, %p332
    %s334 = ssub.s32 %s20, %s27
    %p335 = scmp.eq.s32.totalorder %s334, 0
    %s337 = sadd.s32 %s336, 1
    %s338 = scalar_select %p335, %s336, %s337
    %p341 = pneg %p335
    %p342 = scmp.eq.s32.totalorder %s20, 1
    %p343 = por %p341, %p342
    %p344 = scmp.ne.s32.totalorder %s336, %s339
    %p345 = scmp.eq.s32.totalorder %s20, 0
    %p346 = por %p344, %p345
    %p347 = scmp.ne.s32.totalorder %s336, %s339
    %p348 = scmp.eq.s32.totalorder %s25, 1
    %p349 = por %p347, %p348
    %p350 = scmp.ne.s32.totalorder %s339, %s340
    %p351 = scmp.eq.s32.totalorder %s25, 0
    %p352 = por %p350, %p351
    %p353 = scmp.ne.s32.totalorder %s339, %s340
    %p354 = scmp.eq.s32.totalorder %s26, 1
    %p355 = por %p353, %p354
    %p357 = scmp.ne.s32.totalorder %s340, %s356
    %p358 = scmp.eq.s32.totalorder %s26, 0
    %p359 = por %p357, %p358
    %p360 = scmp.le.s32.totalorder 1, %s20
    %p361 = scmp.lt.s32.totalorder %s20, 3
    %p362 = pnand %p360, %p361
    %p363 = pneg %p362
    // Predicated region
    $region9: #{moco_forward.3} parent=5 // pred_check
      _
    $region10: #{moco_forward.3} parent=5 // pred_check_branch
      %365 = sbr.rel (%p362) target = $region12
    $region11: #{moco_forward.3} parent=5 // pred_region
      %s366 = ssub.s32 %s20, 1
      // Predicated region
      $region13: #{moco_forward.3} parent=11 // pred_check
        %p367 = pneg %p95
      $region14: #{moco_forward.3} parent=11 // pred_check_branch
        %369 = sbr.rel (%p367) target = $region16
      $region15: #{moco_forward.3} parent=11 // pred_region
        _
      $region16: #{moco_forward.3} parent=11 // pred_fallthru
        _
      // Predicated region
      $region17: #{moco_forward.3} parent=11 // pred_check
        %p370 = pneg %p116
      $region18: #{moco_forward.3} parent=11 // pred_check_branch
        %372 = sbr.rel (%p370) target = $region20
      $region19: #{moco_forward.3} parent=11 // pred_region
        _
      $region20: #{moco_forward.3} parent=11 // pred_fallthru
        _
      // Predicated region
      $region21: #{moco_forward.3} parent=11 // pred_check
        %p373 = pneg %p137
      $region22: #{moco_forward.3} parent=11 // pred_check_branch
        %375 = sbr.rel (%p373) target = $region24
      $region23: #{moco_forward.3} parent=11 // pred_region
        _
      $region24: #{moco_forward.3} parent=11 // pred_fallthru
        _
      // Predicated region
      $region25: #{moco_forward.3} parent=11 // pred_check
        %p376 = pneg %p158
      $region26: #{moco_forward.3} parent=11 // pred_check_branch
        %378 = sbr.rel (%p376) target = $region28
      $region27: #{moco_forward.3} parent=11 // pred_region
        _
      $region28: #{moco_forward.3} parent=11 // pred_fallthru
        _
      // Predicated region
      $region29: #{moco_forward.3} parent=11 // pred_check
        %p379 = pneg %p179
      $region30: #{moco_forward.3} parent=11 // pred_check_branch
        %381 = sbr.rel (%p379) target = $region32
      $region31: #{moco_forward.3} parent=11 // pred_region
        _
      $region32: #{moco_forward.3} parent=11 // pred_fallthru
        _
      // Predicated region
      $region33: #{moco_forward.3} parent=11 // pred_check
        %p382 = pneg %p200
      $region34: #{moco_forward.3} parent=11 // pred_check_branch
        %384 = sbr.rel (%p382) target = $region36
      $region35: #{moco_forward.3} parent=11 // pred_region
        _
      $region36: #{moco_forward.3} parent=11 // pred_fallthru
        _
      // Predicated region
      $region37: #{moco_forward.3} parent=11 // pred_check
        %p385 = pneg %p221
      $region38: #{moco_forward.3} parent=11 // pred_check_branch
        %387 = sbr.rel (%p385) target = $region40
      $region39: #{moco_forward.3} parent=11 // pred_region
        _
      $region40: #{moco_forward.3} parent=11 // pred_fallthru
        _
      // Predicated region
      $region41: #{moco_forward.3} parent=11 // pred_check
        %p388 = pneg %p242
      $region42: #{moco_forward.3} parent=11 // pred_check_branch
        %390 = sbr.rel (%p388) target = $region44
      $region43: #{moco_forward.3} parent=11 // pred_region
        _
      $region44: #{moco_forward.3} parent=11 // pred_fallthru
        _
      // Predicated region
      $region45: #{moco_forward.3} parent=11 // pred_check
        %p391 = pneg %p263
      $region46: #{moco_forward.3} parent=11 // pred_check_branch
        %393 = sbr.rel (%p391) target = $region48
      $region47: #{moco_forward.3} parent=11 // pred_region
        _
      $region48: #{moco_forward.3} parent=11 // pred_fallthru
        _
      // Predicated region
      $region49: #{moco_forward.3} parent=11 // pred_check
        %p394 = pneg %p284
      $region50: #{moco_forward.3} parent=11 // pred_check_branch
        %396 = sbr.rel (%p394) target = $region52
      $region51: #{moco_forward.3} parent=11 // pred_region
        _
      $region52: #{moco_forward.3} parent=11 // pred_fallthru
        _
      // Predicated region
      $region53: #{moco_forward.3} parent=11 // pred_check
        %p397 = pneg %p305
      $region54: #{moco_forward.3} parent=11 // pred_check_branch
        %399 = sbr.rel (%p397) target = $region56
      $region55: #{moco_forward.3} parent=11 // pred_region
        _
      $region56: #{moco_forward.3} parent=11 // pred_fallthru
        _
      // Predicated region
      $region57: #{moco_forward.3} parent=11 // pred_check
        %p400 = pneg %p326
      $region58: #{moco_forward.3} parent=11 // pred_check_branch
        %402 = sbr.rel (%p400) target = $region60
      $region59: #{moco_forward.3} parent=11 // pred_region
        _
      $region60: #{moco_forward.3} parent=11 // pred_fallthru
        _
    $region12: #{moco_forward.3} parent=5 // pred_fallthru
      _
    %p403 = scmp.lt.s32.totalorder %s20, 2
    // Predicated region
    $region61: #{moco_forward.3} parent=5 // pred_check
      %p404 = pneg %p403
    $region62: #{moco_forward.3} parent=5 // pred_check_branch
      %406 = sbr.rel (%p404) target = $region64
    $region63: #{moco_forward.3} parent=5 // pred_region
      // Predicated region
      $region65: #{moco_forward.3} parent=63 // pred_check
        %p407 = pneg %p40
      $region66: #{moco_forward.3} parent=63 // pred_check_branch
        %409 = sbr.rel (%p407) target = $region68
      $region67: #{moco_forward.3} parent=63 // pred_region
        %p410 = scmp.lt.s32.totalorder %s20, 1
        %s411 = scalar_select %p410, %s20, 1
        %s412 = smul.addr %s411, 16
        %s413 = smul.addr %s412, 8
        %s414 = scalar_lea.vmem %s0, %s413
      $region68: #{moco_forward.3} parent=63 // pred_fallthru
        _
      // Predicated region
      $region69: #{moco_forward.3} parent=63 // pred_check
        %p415 = pneg %p68
      $region70: #{moco_forward.3} parent=63 // pred_check_branch
        %417 = sbr.rel (%p415) target = $region72
      $region71: #{moco_forward.3} parent=63 // pred_region
        %s418 = ssub.s32 1, %s20
        %p419 = scmp.lt.s32.totalorder %s418, 1
        %s420 = scalar_select %p419, %s418, 1
        %s421 = smul.addr %s420, 16
        %s422 = smul.addr %s421, 8
        %s423 = scalar_lea.vmem %s1, %s422
        %s424 = ssub.s32 1, %s20
      $region72: #{moco_forward.3} parent=63 // pred_fallthru
        _
    $region64: #{moco_forward.3} parent=5 // pred_fallthru
      _
    %p425 = scmp.le.s32.totalorder 1, %s20
    %p426 = scmp.lt.s32.totalorder %s20, 3
    %p427 = pnand %p425, %p426
    %p428 = pneg %p427
    // Predicated region
    $region73: #{moco_forward.3} parent=5 // pred_check
      _
    $region74: #{moco_forward.3} parent=5 // pred_check_branch
      %430 = sbr.rel (%p427) target = $region76
    $region75: #{moco_forward.3} parent=5 // pred_region
      %s431 = ssub.s32 %s20, 1
      %p432 = scmp.lt.s32.totalorder %s25, 1
      %s433 = scalar_select %p432, %s25, 1
      %s434 = smul.addr %s433, 16
      %s435 = smul.addr %s434, 8
      %s436 = scalar_lea.vmem %s0, %s435
      %p437 = pneg %p46
      %p438 = pneg %p43
      %s439 = ssub.s32 1, %s25
      %p440 = scmp.lt.s32.totalorder %s439, 1
      %s441 = scalar_select %p440, %s439, 1
      %s442 = smul.addr %s441, 16
      %s443 = smul.addr %s442, 8
      %s444 = scalar_lea.vmem %s1, %s443
      %p445 = pneg %p74
      %p446 = pneg %p71
      %p447 = pneg %p95
      %p448 = pneg %p92
      %p449 = pneg %p116
      %p450 = pneg %p113
      %p451 = pneg %p137
      %p452 = pneg %p134
      %p453 = pneg %p158
      %p454 = pneg %p155
      %p455 = pneg %p179
      %p456 = pneg %p176
      %p457 = pneg %p200
      %p458 = pneg %p197
      %p459 = pneg %p221
      %p460 = pneg %p218
      %p461 = pneg %p242
      %p462 = pneg %p239
      %p463 = pneg %p263
      %p464 = pneg %p260
      %p465 = pneg %p284
      %p466 = pneg %p281
      %p467 = pneg %p305
      %p468 = pneg %p302
      %p469 = pneg %p326
      %p470 = pneg %p323
      %p471 = pneg %p352
      %p472 = pneg %p349
      %p473 = scmp.lt.s32.totalorder %s25, 1
      %s474 = scalar_select %p473, %s25, 1
      %s475 = smul.addr %s474, 8
      %s476 = scalar_lea.vmem %s14, %s475
      %p477 = scmp.lt.s32.totalorder %s25, 1
      %s478 = scalar_select %p477, %s25, 1
      %s479 = smul.addr %s478, 16
      %s480 = smul.addr %s479, 8
      %s481 = scalar_lea.vmem %s0, %s480
      %s482 = ssub.s32 1, %s25
      %p483 = scmp.lt.s32.totalorder %s482, 1
      %s484 = scalar_select %p483, %s482, 1
      %s485 = smul.addr %s484, 16
      %s486 = smul.addr %s485, 8
      %s487 = scalar_lea.vmem %s1, %s486
      %s488 = ssub.s32 1, %s25
      %p489 = scmp.lt.s32.totalorder %s25, 1
      %s490 = scalar_select %p489, %s25, 1
      %s491 = smul.addr %s490, 8
      %s492 = scalar_lea.vmem %s14, %s491
      %v494 = vld [vmem:[%s481] sm:$0xff]
      %v495 = vld [vmem:[%s481 + $0x8] sm:$0xff]
      %v496 = vld [vmem:[%s481 + $0x10] sm:$0xff]
      %v497 = vld [vmem:[%s481 + $0x18] sm:$0xff]
      %v498 = vld [vmem:[%s481 + $0x20] sm:$0xff]
      %v499 = vld [vmem:[%s481 + $0x28] sm:$0xff]
      %v500 = vld [vmem:[%s481 + $0x30] sm:$0xff]
      %v501 = vld [vmem:[%s481 + $0x38] sm:$0xff]
      %v502 = vld [vmem:[%s481 + $0x40] sm:$0xff]
      %v503 = vld [vmem:[%s481 + $0x48] sm:$0xff]
      %v504 = vld [vmem:[%s481 + $0x50] sm:$0xff]
      %v505 = vld [vmem:[%s481 + $0x58] sm:$0xff]
      %v506 = vld [vmem:[%s481 + $0x60] sm:$0xff]
      %v507 = vld [vmem:[%s481 + $0x68] sm:$0xff]
      %v508 = vld [vmem:[%s481 + $0x70] sm:$0xff]
      %v509 = vld [vmem:[%s481 + $0x78] sm:$0xff]
      %v510 = vadd.f32 %v494, %v495
      %511 = vadd.xlane.f32.xlu0 %v510
      %v512 = vpop.xlane.xlu0 %511
      %v513 = vadd.f32 %v496, %v497
      %514 = vadd.xlane.f32.xlu0 %v513
      %v515 = vpop.xlane.xlu0 %514
      %v516 = vadd.f32 %v498, %v499
      %517 = vadd.xlane.f32.xlu0 %v516
      %v518 = vpop.xlane.xlu0 %517
      %v519 = vadd.f32 %v500, %v501
      %520 = vadd.xlane.f32.xlu0 %v519
      %v521 = vpop.xlane.xlu0 %520
      %v522 = vadd.f32 %v502, %v503
      %523 = vadd.xlane.f32.xlu0 %v522
      %v524 = vpop.xlane.xlu0 %523
      %v525 = vadd.f32 %v504, %v505
      %526 = vadd.xlane.f32.xlu0 %v525
      %v527 = vpop.xlane.xlu0 %526
      %v528 = vadd.f32 %v506, %v507
      %529 = vadd.xlane.f32.xlu0 %v528
      %v530 = vpop.xlane.xlu0 %529
      %v531 = vadd.f32 %v508, %v509
      %532 = vadd.xlane.f32.xlu0 %v531
      %v533 = vpop.xlane.xlu0 %532
      %v534 = vrcp.pop 256.0
      %v535 = vmul.f32 %v512, %v534
      %v536 = vmul.f32 %v515, %v534
      %v537 = vmul.f32 %v518, %v534
      %v538 = vmul.f32 %v521, %v534
      %v539 = vmul.f32 %v524, %v534
      %v540 = vmul.f32 %v527, %v534
      %v541 = vmul.f32 %v530, %v534
      %v542 = vmul.f32 %v533, %v534
      %v543 = vld [vmem:[%s487] sm:$0xff]
      %v544 = vld [vmem:[%s487 + $0x8] sm:$0xff]
      %v545 = vld [vmem:[%s487 + $0x10] sm:$0xff]
      %v546 = vld [vmem:[%s487 + $0x18] sm:$0xff]
      %v547 = vld [vmem:[%s487 + $0x20] sm:$0xff]
      %v548 = vld [vmem:[%s487 + $0x28] sm:$0xff]
      %v549 = vld [vmem:[%s487 + $0x30] sm:$0xff]
      %v550 = vld [vmem:[%s487 + $0x38] sm:$0xff]
      %v551 = vld [vmem:[%s487 + $0x40] sm:$0xff]
      %v552 = vld [vmem:[%s487 + $0x48] sm:$0xff]
      %v553 = vld [vmem:[%s487 + $0x50] sm:$0xff]
      %v554 = vld [vmem:[%s487 + $0x58] sm:$0xff]
      %v555 = vld [vmem:[%s487 + $0x60] sm:$0xff]
      %v556 = vld [vmem:[%s487 + $0x68] sm:$0xff]
      %v557 = vld [vmem:[%s487 + $0x70] sm:$0xff]
      %v558 = vld [vmem:[%s487 + $0x78] sm:$0xff]
      %v559 = vadd.f32 %v543, %v544
      %560 = vadd.xlane.f32.xlu0 %v559
      %v561 = vpop.xlane.xlu0 %560
      %v562 = vadd.f32 %v545, %v546
      %563 = vadd.xlane.f32.xlu0 %v562
      %v564 = vpop.xlane.xlu0 %563
      %v565 = vadd.f32 %v547, %v548
      %566 = vadd.xlane.f32.xlu0 %v565
      %v567 = vpop.xlane.xlu0 %566
      %v568 = vadd.f32 %v549, %v550
      %569 = vadd.xlane.f32.xlu0 %v568
      %v570 = vpop.xlane.xlu0 %569
      %v571 = vadd.f32 %v551, %v552
      %572 = vadd.xlane.f32.xlu0 %v571
      %v573 = vpop.xlane.xlu0 %572
      %v574 = vadd.f32 %v553, %v554
      %575 = vadd.xlane.f32.xlu0 %v574
      %v576 = vpop.xlane.xlu0 %575
      %v577 = vadd.f32 %v555, %v556
      %578 = vadd.xlane.f32.xlu0 %v577
      %v579 = vpop.xlane.xlu0 %578
      %v580 = vadd.f32 %v557, %v558
      %581 = vadd.xlane.f32.xlu0 %v580
      %v582 = vpop.xlane.xlu0 %581
      %v583 = vmul.f32 %v561, %v534
      %v584 = vmul.f32 %v564, %v534
      %v585 = vmul.f32 %v567, %v534
      %v586 = vmul.f32 %v570, %v534
      %v587 = vmul.f32 %v573, %v534
      %v588 = vmul.f32 %v576, %v534
      %v589 = vmul.f32 %v579, %v534
      %v590 = vmul.f32 %v582, %v534
      %v591 = vpack.c.bf16 %v535, %v535
      %v592 = vpack.c.bf16 %v536, %v536
      %v593 = vpack.c.bf16 %v537, %v537
      %v594 = vpack.c.bf16 %v538, %v538
      %v595 = vpack.c.bf16 %v539, %v539
      %v596 = vpack.c.bf16 %v540, %v540
      %v597 = vpack.c.bf16 %v541, %v541
      %v598 = vpack.c.bf16 %v542, %v542
      %v599 = vld [vmem:[%s2] sm:$0xff]
      %v600 = vld [vmem:[%s3] sm:$0x3]
      %v602 = vlaneseq
      %v603 = vshrl.u32 %v602, 7
      %v604 = vsub.s32 0, %v603
      %v605 = vrot.slane %v600, %v604
      %v606 = vlaneseq
      %v607 = vshrl.u32 %v606, 7
      %v608 = vsub.s32 1, %v607
      %v609 = vrot.slane %v600, %v608
      %v620 = vunpack.c.l.b16 %v591
      %v621 = vunpack.c.l.b16 %v592
      %v622 = vunpack.c.l.b16 %v593
      %v623 = vunpack.c.l.b16 %v594
      %v624 = vunpack.c.l.b16 %v595
      %v625 = vunpack.c.l.b16 %v596
      %v626 = vunpack.c.l.b16 %v597
      %v627 = vunpack.c.l.b16 %v598
      %v628 = vlaneseq
      %v629 = vand.u32 %v628, 127
      %v630 = vlaneseq
      %v631 = vshrl.u32 %v630, 7
      %v632 = vsub.s32 %v629, %v631
      %v633 = vrot.slane %v620, %v632
      %v634 = vlaneseq
      %v635 = vshrl.u32 %v634, 7
      %v636 = vsub.s32 %v629, %v635
      %v637 = vrot.slane %v621, %v636
      %v638 = vlaneseq
      %v639 = vshrl.u32 %v638, 7
      %v640 = vsub.s32 %v629, %v639
      %v641 = vrot.slane %v622, %v640
      %v642 = vlaneseq
      %v643 = vshrl.u32 %v642, 7
      %v644 = vsub.s32 %v629, %v643
      %v645 = vrot.slane %v623, %v644
      %v646 = vlaneseq
      %v647 = vshrl.u32 %v646, 7
      %v648 = vsub.s32 %v629, %v647
      %v649 = vrot.slane %v624, %v648
      %v650 = vlaneseq
      %v651 = vshrl.u32 %v650, 7
      %v652 = vsub.s32 %v629, %v651
      %v653 = vrot.slane %v625, %v652
      %v654 = vlaneseq
      %v655 = vshrl.u32 %v654, 7
      %v656 = vsub.s32 %v629, %v655
      %v657 = vrot.slane %v626, %v656
      %v658 = vlaneseq
      %v659 = vshrl.u32 %v658, 7
      %v660 = vsub.s32 %v629, %v659
      %v661 = vrot.slane %v627, %v660
      %vm662 = vcmask 1041409
      %v663 = vsel %vm662, %v637, %v633
      %vm664 = vcmask 1042434
      %v665 = vsel %vm664, %v641, %v663
      %vm666 = vcmask 1043459
      %v667 = vsel %vm666, %v645, %v665
      %vm668 = vcmask 1044484
      %v669 = vsel %vm668, %v649, %v667
      %vm670 = vcmask 1045509
      %v671 = vsel %vm670, %v653, %v669
      %vm672 = vcmask 1046534
      %v673 = vsel %vm672, %v657, %v671
      %vm674 = vcmask 1047559
      %v675 = vsel %vm674, %v661, %v673
      %v676 = vpack.c.b16 %v675, %v675
      %v678 = vunpack.c.l.b16 %v599
      %v679 = vunpack.c.h.b16 %v599
      %v680 = vpack.c.b16 %v678, %v678
      %v681 = vpack.c.b16 %v679, %v679
      %vm682 = vcmask 64512
      %v684 = vsel %vm682, %v676, 0
      %vm686 = vcmask 1043456
      %v688 = vsel %vm686, %v680, 0
      %v691 = vsel %vm686, %v681, 0
      %693 = vmatprep.subr.bf16.mxu0 0
      %694 = vmatpush1.bf16.msra.mxu0 0
      %695 = vmatprep.subr.bf16.mxu0 0
      %696 = vmatpush1.bf16.msra.mxu0 0
      %697 = vmatprep.subr.bf16.mxu0 0
      %698 = vmatpush1.bf16.msra.mxu0 0
      %699 = vmatprep.subr.bf16.mxu0 0
      %700 = vmatpush1.bf16.msra.mxu0 0
      %701 = vmatprep.subr.bf16.mxu0 0
      %702 = vmatpush1.bf16.msra.mxu0 0
      %703 = vmatprep.subr.bf16.mxu0 0
      %704 = vmatpush1.bf16.msra.mxu0 0
      %705 = vmatprep.subr.bf16.mxu0 0
      %706 = vmatpush1.bf16.msra.mxu0 0
      %707 = vmatprep.subr.bf16.mxu0 %v691
      %708 = vmatpush1.bf16.msra.mxu0 %v688
      %709 = vmatprep.subr.bf16.mxu0 0
      %710 = vmatpush2.bf16.msra.mxu0 0
      %711 = vmatprep.subr.bf16.mxu0 0
      %712 = vmatpush2.bf16.msra.mxu0 0
      %713 = vmatprep.subr.bf16.mxu0 0
      %714 = vmatpush2.bf16.msra.mxu0 0
      %715 = vmatprep.subr.bf16.mxu0 0
      %716 = vmatpush2.bf16.msra.mxu0 0
      %717 = vmatprep.subr.bf16.mxu0 0
      %718 = vmatpush2.bf16.msra.mxu0 0
      %719 = vmatprep.subr.bf16.mxu0 0
      %720 = vmatpush2.bf16.msra.mxu0 0
      %721 = vmatprep.subr.bf16.mxu0 0
      %722 = vmatpush2.bf16.msra.mxu0 0
      %723 = vmatprep.subr.bf16.mxu0 0
      %724 = vmatpush2.bf16.msra.mxu0 0
      %725 = vmatprep.mubr.bf16.mxu0 0
      %726 = vmatmul.mubr.bf16.gmra.mxu0 %v684
      %v727 = vpop.f32.mrf.mxu0
      %v728 = vadd.f32 %v605, %v727
      %v729 = vpop.f32.mrf.mxu0
      %v730 = vadd.f32 %v609, %v729
      %v731 = vpop.f32.mrf.mxu0
      %v732 = vpop.f32.mrf.mxu0
      %733 = vdwg.mxu0
      %v734 = vmax.f32 %v728, 0.0
      %v735 = vmax.f32 %v730, 0.0
      %v736 = vpack.c.bf16 %v734, %v734
      %v737 = vpack.c.bf16 %v735, %v735
      %v738 = vld [vmem:[%s4] sm:$0xf]
      %v739 = vld [vmem:[%s4 + $0x4] sm:$0xf]
      %v740 = vld [vmem:[%s4 + $0x8] sm:$0xf]
      %v741 = vld [vmem:[%s4 + $0xc] sm:$0xf]
      %v742 = vld [vmem:[%s4 + $0x10] sm:$0xf]
      %v743 = vld [vmem:[%s4 + $0x14] sm:$0xf]
      %v744 = vld [vmem:[%s4 + $0x18] sm:$0xf]
      %v745 = vld [vmem:[%s4 + $0x1c] sm:$0xf]
      %v746 = vld [vmem:[%s4 + $0x20] sm:$0xf]
      %v747 = vld [vmem:[%s4 + $0x24] sm:$0xf]
      %v748 = vld [vmem:[%s4 + $0x28] sm:$0xf]
      %v749 = vld [vmem:[%s4 + $0x2c] sm:$0xf]
      %v750 = vld [vmem:[%s4 + $0x30] sm:$0xf]
      %v751 = vld [vmem:[%s4 + $0x34] sm:$0xf]
      %v752 = vld [vmem:[%s4 + $0x38] sm:$0xf]
      %v753 = vld [vmem:[%s4 + $0x3c] sm:$0xf]
      %v754 = vld [vmem:[%s4 + $0x40] sm:$0xf]
      %v755 = vld [vmem:[%s4 + $0x44] sm:$0xf]
      %v756 = vld [vmem:[%s4 + $0x48] sm:$0xf]
      %v757 = vld [vmem:[%s4 + $0x4c] sm:$0xf]
      %v758 = vld [vmem:[%s4 + $0x50] sm:$0xf]
      %v759 = vld [vmem:[%s4 + $0x54] sm:$0xf]
      %v760 = vld [vmem:[%s4 + $0x58] sm:$0xf]
      %v761 = vld [vmem:[%s4 + $0x5c] sm:$0xf]
      %v762 = vld [vmem:[%s4 + $0x60] sm:$0xf]
      %v763 = vld [vmem:[%s4 + $0x64] sm:$0xf]
      %v764 = vld [vmem:[%s4 + $0x68] sm:$0xf]
      %v765 = vld [vmem:[%s4 + $0x6c] sm:$0xf]
      %v766 = vld [vmem:[%s4 + $0x70] sm:$0xf]
      %v767 = vld [vmem:[%s4 + $0x74] sm:$0xf]
      %v768 = vld [vmem:[%s4 + $0x78] sm:$0xf]
      %v769 = vld [vmem:[%s4 + $0x7c] sm:$0xf]
      %v770 = vld [vmem:[%s5] sm:$0x1]
      %v772 = vlaneseq
      %v773 = vshrl.u32 %v772, 7
      %v774 = vsub.s32 0, %v773
      %v775 = vrot.slane %v770, %v774
      %v809 = vunpack.c.l.b16 %v738
      %v810 = vunpack.c.l.b16 %v739
      %v811 = vunpack.c.l.b16 %v740
      %v812 = vunpack.c.l.b16 %v741
      %v813 = vunpack.c.l.b16 %v742
      %v814 = vunpack.c.l.b16 %v743
      %v815 = vunpack.c.l.b16 %v744
      %v816 = vunpack.c.l.b16 %v745
      %v817 = vunpack.c.l.b16 %v746
      %v818 = vunpack.c.l.b16 %v747
      %v819 = vunpack.c.l.b16 %v748
      %v820 = vunpack.c.l.b16 %v749
      %v821 = vunpack.c.l.b16 %v750
      %v822 = vunpack.c.l.b16 %v751
      %v823 = vunpack.c.l.b16 %v752
      %v824 = vunpack.c.l.b16 %v753
      %v825 = vunpack.c.l.b16 %v754
      %v826 = vunpack.c.l.b16 %v755
      %v827 = vunpack.c.l.b16 %v756
      %v828 = vunpack.c.l.b16 %v757
      %v829 = vunpack.c.l.b16 %v758
      %v830 = vunpack.c.l.b16 %v759
      %v831 = vunpack.c.l.b16 %v760
      %v832 = vunpack.c.l.b16 %v761
      %v833 = vunpack.c.l.b16 %v762
      %v834 = vunpack.c.l.b16 %v763
      %v835 = vunpack.c.l.b16 %v764
      %v836 = vunpack.c.l.b16 %v765
      %v837 = vunpack.c.l.b16 %v766
      %v838 = vunpack.c.l.b16 %v767
      %v839 = vunpack.c.l.b16 %v768
      %v840 = vunpack.c.l.b16 %v769
      %v841 = vpack.c.b16 %v810, %v809
      %v842 = vpack.c.b16 %v812, %v811
      %v843 = vpack.c.b16 %v814, %v813
      %v844 = vpack.c.b16 %v816, %v815
      %v845 = vpack.c.b16 %v818, %v817
      %v846 = vpack.c.b16 %v820, %v819
      %v847 = vpack.c.b16 %v822, %v821
      %v848 = vpack.c.b16 %v824, %v823
      %v849 = vpack.c.b16 %v826, %v825
      %v850 = vpack.c.b16 %v828, %v827
      %v851 = vpack.c.b16 %v830, %v829
      %v852 = vpack.c.b16 %v832, %v831
      %v853 = vpack.c.b16 %v834, %v833
      %v854 = vpack.c.b16 %v836, %v835
      %v855 = vpack.c.b16 %v838, %v837
      %v856 = vpack.c.b16 %v840, %v839
      %873 = vmatprep.subr.bf16.mxu0 0
      %874 = vmatpush1.bf16.msra.mxu0 %v848
      %875 = vmatprep.subr.bf16.mxu0 0
      %876 = vmatpush1.bf16.msra.mxu0 %v847
      %877 = vmatprep.subr.bf16.mxu0 0
      %878 = vmatpush1.bf16.msra.mxu0 %v846
      %879 = vmatprep.subr.bf16.mxu0 0
      %880 = vmatpush1.bf16.msra.mxu0 %v845
      %881 = vmatprep.subr.bf16.mxu0 0
      %882 = vmatpush1.bf16.msra.mxu0 %v844
      %883 = vmatprep.subr.bf16.mxu0 0
      %884 = vmatpush1.bf16.msra.mxu0 %v843
      %885 = vmatprep.subr.bf16.mxu0 0
      %886 = vmatpush1.bf16.msra.mxu0 %v842
      %887 = vmatprep.subr.bf16.mxu0 0
      %888 = vmatpush1.bf16.msra.mxu0 %v841
      %889 = vmatprep.subr.bf16.mxu0 0
      %890 = vmatpush2.bf16.msra.mxu0 %v856
      %891 = vmatprep.subr.bf16.mxu0 0
      %892 = vmatpush2.bf16.msra.mxu0 %v855
      %893 = vmatprep.subr.bf16.mxu0 0
      %894 = vmatpush2.bf16.msra.mxu0 %v854
      %895 = vmatprep.subr.bf16.mxu0 0
      %896 = vmatpush2.bf16.msra.mxu0 %v853
      %897 = vmatprep.subr.bf16.mxu0 0
      %898 = vmatpush2.bf16.msra.mxu0 %v852
      %899 = vmatprep.subr.bf16.mxu0 0
      %900 = vmatpush2.bf16.msra.mxu0 %v851
      %901 = vmatprep.subr.bf16.mxu0 0
      %902 = vmatpush2.bf16.msra.mxu0 %v850
      %903 = vmatprep.subr.bf16.mxu0 0
      %904 = vmatpush2.bf16.msra.mxu0 %v849
      %905 = vmatprep.mubr.bf16.mxu0 %v737
      %906 = vmatmul.mubr.bf16.gmra.mxu0 %v736
      %v907 = vpop.f32.mrf.mxu0
      %v908 = vadd.f32 %v775, %v907
      %v909 = vpop.f32.mrf.mxu0
      %v910 = vpop.f32.mrf.mxu0
      %v911 = vpop.f32.mrf.mxu0
      %912 = vdwg.mxu0
      %v913 = vpack.c.bf16 %v908, %v908
      %v914 = vld [vmem:[%s10] sm:$0xff]
      %v915 = vld [vmem:[%s10 + $0x8] sm:$0xff]
      %v916 = vld [vmem:[%s10 + $0x10] sm:$0xff]
      %v917 = vld [vmem:[%s10 + $0x18] sm:$0xff]
      %v918 = vld [vmem:[%s10 + $0x20] sm:$0xff]
      %v919 = vld [vmem:[%s10 + $0x28] sm:$0xff]
      %v920 = vld [vmem:[%s10 + $0x30] sm:$0xff]
      %v921 = vld [vmem:[%s10 + $0x38] sm:$0xff]
      %v922 = vld [vmem:[%s10 + $0x40] sm:$0xff]
      %v923 = vld [vmem:[%s10 + $0x48] sm:$0xff]
      %v924 = vld [vmem:[%s10 + $0x50] sm:$0xff]
      %v925 = vld [vmem:[%s10 + $0x58] sm:$0xff]
      %v926 = vld [vmem:[%s10 + $0x60] sm:$0xff]
      %v927 = vld [vmem:[%s10 + $0x68] sm:$0xff]
      %v928 = vld [vmem:[%s10 + $0x70] sm:$0xff]
      %v929 = vld [vmem:[%s10 + $0x78] sm:$0xff]
      %v946 = vunpack.c.l.b16 %v914
      %v947 = vunpack.c.h.b16 %v914
      %v948 = vunpack.c.l.b16 %v915
      %v949 = vunpack.c.h.b16 %v915
      %v950 = vunpack.c.l.b16 %v916
      %v951 = vunpack.c.h.b16 %v916
      %v952 = vunpack.c.l.b16 %v917
      %v953 = vunpack.c.h.b16 %v917
      %v954 = vunpack.c.l.b16 %v918
      %v955 = vunpack.c.h.b16 %v918
      %v956 = vunpack.c.l.b16 %v919
      %v957 = vunpack.c.h.b16 %v919
      %v958 = vunpack.c.l.b16 %v920
      %v959 = vunpack.c.h.b16 %v920
      %v960 = vunpack.c.l.b16 %v921
      %v961 = vunpack.c.h.b16 %v921
      %v962 = vunpack.c.l.b16 %v922
      %v963 = vunpack.c.h.b16 %v922
      %v964 = vunpack.c.l.b16 %v923
      %v965 = vunpack.c.h.b16 %v923
      %v966 = vunpack.c.l.b16 %v924
      %v967 = vunpack.c.h.b16 %v924
      %v968 = vunpack.c.l.b16 %v925
      %v969 = vunpack.c.h.b16 %v925
      %v970 = vunpack.c.l.b16 %v926
      %v971 = vunpack.c.h.b16 %v926
      %v972 = vunpack.c.l.b16 %v927
      %v973 = vunpack.c.h.b16 %v927
      %v974 = vunpack.c.l.b16 %v928
      %v975 = vunpack.c.h.b16 %v928
      %v976 = vunpack.c.l.b16 %v929
      %v977 = vunpack.c.h.b16 %v929
      %v978 = vpack.c.b16 %v948, %v946
      %v979 = vpack.c.b16 %v949, %v947
      %v980 = vpack.c.b16 %v952, %v950
      %v981 = vpack.c.b16 %v953, %v951
      %v982 = vpack.c.b16 %v956, %v954
      %v983 = vpack.c.b16 %v957, %v955
      %v984 = vpack.c.b16 %v960, %v958
      %v985 = vpack.c.b16 %v961, %v959
      %v986 = vpack.c.b16 %v964, %v962
      %v987 = vpack.c.b16 %v965, %v963
      %v988 = vpack.c.b16 %v968, %v966
      %v989 = vpack.c.b16 %v969, %v967
      %v990 = vpack.c.b16 %v972, %v970
      %v991 = vpack.c.b16 %v973, %v971
      %v992 = vpack.c.b16 %v976, %v974
      %v993 = vpack.c.b16 %v977, %v975
      %1010 = vmatprep.subr.bf16.mxu0 %v993
      %1011 = vmatpush1.bf16.msra.mxu0 %v992
      %1012 = vmatprep.subr.bf16.mxu0 %v991
      %1013 = vmatpush1.bf16.msra.mxu0 %v990
      %1014 = vmatprep.subr.bf16.mxu0 %v989
      %1015 = vmatpush1.bf16.msra.mxu0 %v988
      %1016 = vmatprep.subr.bf16.mxu0 %v987
      %1017 = vmatpush1.bf16.msra.mxu0 %v986
      %1018 = vmatprep.subr.bf16.mxu0 %v985
      %1019 = vmatpush1.bf16.msra.mxu0 %v984
      %1020 = vmatprep.subr.bf16.mxu0 %v983
      %1021 = vmatpush1.bf16.msra.mxu0 %v982
      %1022 = vmatprep.subr.bf16.mxu0 %v981
      %1023 = vmatpush1.bf16.msra.mxu0 %v980
      %1024 = vmatprep.subr.bf16.mxu0 %v979
      %1025 = vmatpush1.bf16.msra.mxu0 %v978
      %1026 = vmatprep.subr.bf16.mxu0 0
      %1027 = vmatpush2.bf16.msra.mxu0 0
      %1028 = vmatprep.subr.bf16.mxu0 0
      %1029 = vmatpush2.bf16.msra.mxu0 0
      %1030 = vmatprep.subr.bf16.mxu0 0
      %1031 = vmatpush2.bf16.msra.mxu0 0
      %1032 = vmatprep.subr.bf16.mxu0 0
      %1033 = vmatpush2.bf16.msra.mxu0 0
      %1034 = vmatprep.subr.bf16.mxu0 0
      %1035 = vmatpush2.bf16.msra.mxu0 0
      %1036 = vmatprep.subr.bf16.mxu0 0
      %1037 = vmatpush2.bf16.msra.mxu0 0
      %1038 = vmatprep.subr.bf16.mxu0 0
      %1039 = vmatpush2.bf16.msra.mxu0 0
      %1040 = vmatprep.subr.bf16.mxu0 0
      %1041 = vmatpush2.bf16.msra.mxu0 0
      %1042 = vmatprep.mubr.bf16.mxu0 0
      %1043 = vmatmul.mubr.bf16.gmra.mxu0 %v913
      %v1044 = vpop.f32.mrf.mxu0
      %v1045 = vadd.f32 0.0, %v1044
      %v1046 = vpop.f32.mrf.mxu0
      %v1047 = vadd.f32 0.0, %v1046
      %v1048 = vpop.f32.mrf.mxu0
      %v1049 = vpop.f32.mrf.mxu0
      %1050 = vdwg.mxu0
      %v1051 = vrot.slane %v1045, 4
      %v1052 = vadd.f32 %v1045, %v1051
      %v1053 = vrot.slane %v1052, 2
      %v1054 = vadd.f32 %v1052, %v1053
      %v1055 = vrot.slane %v1054, 1
      %v1056 = vadd.f32 %v1054, %v1055
      %v1057 = vrot.slane %v1047, 4
      %v1058 = vadd.f32 %v1047, %v1057
      %v1059 = vrot.slane %v1058, 2
      %v1060 = vadd.f32 %v1058, %v1059
      %v1061 = vrot.slane %v1060, 1
      %v1062 = vadd.f32 %v1060, %v1061
      %v1063 = vrcp.pop 8.0
      %v1064 = vmul.f32 %v1056, %v1063
      %v1065 = vmul.f32 %v1062, %v1063
      %v1066 = vsub.f32 %v1045, %v1064
      %v1067 = vsub.f32 %v1047, %v1065
      %v1068 = vmul.f32 %v1066, %v1066
      %v1069 = vmul.f32 %v1067, %v1067
      %v1070 = vrot.slane %v1068, 4
      %v1071 = vadd.f32 %v1068, %v1070
      %v1072 = vrot.slane %v1071, 2
      %v1073 = vadd.f32 %v1071, %v1072
      %v1074 = vrot.slane %v1073, 1
      %v1075 = vadd.f32 %v1073, %v1074
      %v1076 = vrot.slane %v1069, 4
      %v1077 = vadd.f32 %v1069, %v1076
      %v1078 = vrot.slane %v1077, 2
      %v1079 = vadd.f32 %v1077, %v1078
      %v1080 = vrot.slane %v1079, 1
      %v1081 = vadd.f32 %v1079, %v1080
      %v1082 = vmul.f32 %v1075, %v1063
      %v1083 = vmul.f32 %v1081, %v1063
      %v1084 = vadd.f32 %v1082, 1e-05
      %v1085 = vadd.f32 %v1083, 1e-05
      %v1086 = vrsqrt.pop %v1084
      %v1087 = vrsqrt.pop %v1085
      %v1088 = vmul.f32 %v1066, %v1086
      %v1089 = vmul.f32 %v1067, %v1087
      %v1090 = vld [vmem:[%s11] sm:$0x3]
      %v1092 = vlaneseq
      %v1093 = vshrl.u32 %v1092, 7
      %v1094 = vsub.s32 0, %v1093
      %v1095 = vrot.slane %v1090, %v1094
      %v1096 = vlaneseq
      %v1097 = vshrl.u32 %v1096, 7
      %v1098 = vsub.s32 1, %v1097
      %v1099 = vrot.slane %v1090, %v1098
      %v1102 = vmul.f32 %v1088, %v1095
      %v1103 = vmul.f32 %v1089, %v1099
      %v1104 = vld [vmem:[%s12] sm:$0x3]
      %v1106 = vlaneseq
      %v1107 = vshrl.u32 %v1106, 7
      %v1108 = vsub.s32 0, %v1107
      %v1109 = vrot.slane %v1104, %v1108
      %v1110 = vlaneseq
      %v1111 = vshrl.u32 %v1110, 7
      %v1112 = vsub.s32 1, %v1111
      %v1113 = vrot.slane %v1104, %v1112
      %v1116 = vadd.f32 %v1102, %v1109
      %v1117 = vadd.f32 %v1103, %v1113
      %v1118 = vmax.f32 %v1116, 0.0
      %v1119 = vmax.f32 %v1117, 0.0
      %v1120 = vpack.c.bf16 %v1118, %v1118
      %v1121 = vpack.c.bf16 %v1119, %v1119
      %v1122 = vld [vmem:[%s13] sm:$0xf]
      %v1123 = vld [vmem:[%s13 + $0x4] sm:$0xf]
      %v1124 = vld [vmem:[%s13 + $0x8] sm:$0xf]
      %v1125 = vld [vmem:[%s13 + $0xc] sm:$0xf]
      %v1126 = vld [vmem:[%s13 + $0x10] sm:$0xf]
      %v1127 = vld [vmem:[%s13 + $0x14] sm:$0xf]
      %v1128 = vld [vmem:[%s13 + $0x18] sm:$0xf]
      %v1129 = vld [vmem:[%s13 + $0x1c] sm:$0xf]
      %v1130 = vld [vmem:[%s13 + $0x20] sm:$0xf]
      %v1131 = vld [vmem:[%s13 + $0x24] sm:$0xf]
      %v1132 = vld [vmem:[%s13 + $0x28] sm:$0xf]
      %v1133 = vld [vmem:[%s13 + $0x2c] sm:$0xf]
      %v1134 = vld [vmem:[%s13 + $0x30] sm:$0xf]
      %v1135 = vld [vmem:[%s13 + $0x34] sm:$0xf]
      %v1136 = vld [vmem:[%s13 + $0x38] sm:$0xf]
      %v1137 = vld [vmem:[%s13 + $0x3c] sm:$0xf]
      %v1138 = vld [vmem:[%s13 + $0x40] sm:$0xf]
      %v1139 = vld [vmem:[%s13 + $0x44] sm:$0xf]
      %v1140 = vld [vmem:[%s13 + $0x48] sm:$0xf]
      %v1141 = vld [vmem:[%s13 + $0x4c] sm:$0xf]
      %v1142 = vld [vmem:[%s13 + $0x50] sm:$0xf]
      %v1143 = vld [vmem:[%s13 + $0x54] sm:$0xf]
      %v1144 = vld [vmem:[%s13 + $0x58] sm:$0xf]
      %v1145 = vld [vmem:[%s13 + $0x5c] sm:$0xf]
      %v1146 = vld [vmem:[%s13 + $0x60] sm:$0xf]
      %v1147 = vld [vmem:[%s13 + $0x64] sm:$0xf]
      %v1148 = vld [vmem:[%s13 + $0x68] sm:$0xf]
      %v1149 = vld [vmem:[%s13 + $0x6c] sm:$0xf]
      %v1150 = vld [vmem:[%s13 + $0x70] sm:$0xf]
      %v1151 = vld [vmem:[%s13 + $0x74] sm:$0xf]
      %v1152 = vld [vmem:[%s13 + $0x78] sm:$0xf]
      %v1153 = vld [vmem:[%s13 + $0x7c] sm:$0xf]
      %v1186 = vunpack.c.l.b16 %v1122
      %v1187 = vunpack.c.l.b16 %v1123
      %v1188 = vunpack.c.l.b16 %v1124
      %v1189 = vunpack.c.l.b16 %v1125
      %v1190 = vunpack.c.l.b16 %v1126
      %v1191 = vunpack.c.l.b16 %v1127
      %v1192 = vunpack.c.l.b16 %v1128
      %v1193 = vunpack.c.l.b16 %v1129
      %v1194 = vunpack.c.l.b16 %v1130
      %v1195 = vunpack.c.l.b16 %v1131
      %v1196 = vunpack.c.l.b16 %v1132
      %v1197 = vunpack.c.l.b16 %v1133
      %v1198 = vunpack.c.l.b16 %v1134
      %v1199 = vunpack.c.l.b16 %v1135
      %v1200 = vunpack.c.l.b16 %v1136
      %v1201 = vunpack.c.l.b16 %v1137
      %v1202 = vunpack.c.l.b16 %v1138
      %v1203 = vunpack.c.l.b16 %v1139
      %v1204 = vunpack.c.l.b16 %v1140
      %v1205 = vunpack.c.l.b16 %v1141
      %v1206 = vunpack.c.l.b16 %v1142
      %v1207 = vunpack.c.l.b16 %v1143
      %v1208 = vunpack.c.l.b16 %v1144
      %v1209 = vunpack.c.l.b16 %v1145
      %v1210 = vunpack.c.l.b16 %v1146
      %v1211 = vunpack.c.l.b16 %v1147
      %v1212 = vunpack.c.l.b16 %v1148
      %v1213 = vunpack.c.l.b16 %v1149
      %v1214 = vunpack.c.l.b16 %v1150
      %v1215 = vunpack.c.l.b16 %v1151
      %v1216 = vunpack.c.l.b16 %v1152
      %v1217 = vunpack.c.l.b16 %v1153
      %v1218 = vpack.c.b16 %v1187, %v1186
      %v1219 = vpack.c.b16 %v1189, %v1188
      %v1220 = vpack.c.b16 %v1191, %v1190
      %v1221 = vpack.c.b16 %v1193, %v1192
      %v1222 = vpack.c.b16 %v1195, %v1194
      %v1223 = vpack.c.b16 %v1197, %v1196
      %v1224 = vpack.c.b16 %v1199, %v1198
      %v1225 = vpack.c.b16 %v1201, %v1200
      %v1226 = vpack.c.b16 %v1203, %v1202
      %v1227 = vpack.c.b16 %v1205, %v1204
      %v1228 = vpack.c.b16 %v1207, %v1206
      %v1229 = vpack.c.b16 %v1209, %v1208
      %v1230 = vpack.c.b16 %v1211, %v1210
      %v1231 = vpack.c.b16 %v1213, %v1212
      %v1232 = vpack.c.b16 %v1215, %v1214
      %v1233 = vpack.c.b16 %v1217, %v1216
      %1250 = vmatprep.subr.bf16.mxu0 0
      %1251 = vmatpush1.bf16.msra.mxu0 %v1225
      %1252 = vmatprep.subr.bf16.mxu0 0
      %1253 = vmatpush1.bf16.msra.mxu0 %v1224
      %1254 = vmatprep.subr.bf16.mxu0 0
      %1255 = vmatpush1.bf16.msra.mxu0 %v1223
      %1256 = vmatprep.subr.bf16.mxu0 0
      %1257 = vmatpush1.bf16.msra.mxu0 %v1222
      %1258 = vmatprep.subr.bf16.mxu0 0
      %1259 = vmatpush1.bf16.msra.mxu0 %v1221
      %1260 = vmatprep.subr.bf16.mxu0 0
      %1261 = vmatpush1.bf16.msra.mxu0 %v1220
      %1262 = vmatprep.subr.bf16.mxu0 0
      %1263 = vmatpush1.bf16.msra.mxu0 %v1219
      %1264 = vmatprep.subr.bf16.mxu0 0
      %1265 = vmatpush1.bf16.msra.mxu0 %v1218
      %1266 = vmatprep.subr.bf16.mxu0 0
      %1267 = vmatpush2.bf16.msra.mxu0 %v1233
      %1268 = vmatprep.subr.bf16.mxu0 0
      %1269 = vmatpush2.bf16.msra.mxu0 %v1232
      %1270 = vmatprep.subr.bf16.mxu0 0
      %1271 = vmatpush2.bf16.msra.mxu0 %v1231
      %1272 = vmatprep.subr.bf16.mxu0 0
      %1273 = vmatpush2.bf16.msra.mxu0 %v1230
      %1274 = vmatprep.subr.bf16.mxu0 0
      %1275 = vmatpush2.bf16.msra.mxu0 %v1229
      %1276 = vmatprep.subr.bf16.mxu0 0
      %1277 = vmatpush2.bf16.msra.mxu0 %v1228
      %1278 = vmatprep.subr.bf16.mxu0 0
      %1279 = vmatpush2.bf16.msra.mxu0 %v1227
      %1280 = vmatprep.subr.bf16.mxu0 0
      %1281 = vmatpush2.bf16.msra.mxu0 %v1226
      %1282 = vmatprep.mubr.bf16.mxu0 %v1121
      %1283 = vmatmul.mubr.bf16.gmra.mxu0 %v1120
      %v1284 = vpop.f32.mrf.mxu0
      %v1285 = vadd.f32 0.0, %v1284
      %v1286 = vpop.f32.mrf.mxu0
      %v1287 = vpop.f32.mrf.mxu0
      %v1288 = vpop.f32.mrf.mxu0
      %1289 = vdwg.mxu0
      %v1290 = vpack.c.bf16 %v583, %v583
      %v1291 = vpack.c.bf16 %v584, %v584
      %v1292 = vpack.c.bf16 %v585, %v585
      %v1293 = vpack.c.bf16 %v586, %v586
      %v1294 = vpack.c.bf16 %v587, %v587
      %v1295 = vpack.c.bf16 %v588, %v588
      %v1296 = vpack.c.bf16 %v589, %v589
      %v1297 = vpack.c.bf16 %v590, %v590
      %v1298 = vld [vmem:[%s6] sm:$0xff]
      %v1299 = vld [vmem:[%s7] sm:$0x3]
      %v1301 = vlaneseq
      %v1302 = vshrl.u32 %v1301, 7
      %v1303 = vsub.s32 0, %v1302
      %v1304 = vrot.slane %v1299, %v1303
      %v1305 = vlaneseq
      %v1306 = vshrl.u32 %v1305, 7
      %v1307 = vsub.s32 1, %v1306
      %v1308 = vrot.slane %v1299, %v1307
      %v1319 = vunpack.c.l.b16 %v1290
      %v1320 = vunpack.c.l.b16 %v1291
      %v1321 = vunpack.c.l.b16 %v1292
      %v1322 = vunpack.c.l.b16 %v1293
      %v1323 = vunpack.c.l.b16 %v1294
      %v1324 = vunpack.c.l.b16 %v1295
      %v1325 = vunpack.c.l.b16 %v1296
      %v1326 = vunpack.c.l.b16 %v1297
      %v1327 = vlaneseq
      %v1328 = vshrl.u32 %v1327, 7
      %v1329 = vsub.s32 %v629, %v1328
      %v1330 = vrot.slane %v1319, %v1329
      %v1331 = vlaneseq
      %v1332 = vshrl.u32 %v1331, 7
      %v1333 = vsub.s32 %v629, %v1332
      %v1334 = vrot.slane %v1320, %v1333
      %v1335 = vlaneseq
      %v1336 = vshrl.u32 %v1335, 7
      %v1337 = vsub.s32 %v629, %v1336
      %v1338 = vrot.slane %v1321, %v1337
      %v1339 = vlaneseq
      %v1340 = vshrl.u32 %v1339, 7
      %v1341 = vsub.s32 %v629, %v1340
      %v1342 = vrot.slane %v1322, %v1341
      %v1343 = vlaneseq
      %v1344 = vshrl.u32 %v1343, 7
      %v1345 = vsub.s32 %v629, %v1344
      %v1346 = vrot.slane %v1323, %v1345
      %v1347 = vlaneseq
      %v1348 = vshrl.u32 %v1347, 7
      %v1349 = vsub.s32 %v629, %v1348
      %v1350 = vrot.slane %v1324, %v1349
      %v1351 = vlaneseq
      %v1352 = vshrl.u32 %v1351, 7
      %v1353 = vsub.s32 %v629, %v1352
      %v1354 = vrot.slane %v1325, %v1353
      %v1355 = vlaneseq
      %v1356 = vshrl.u32 %v1355, 7
      %v1357 = vsub.s32 %v629, %v1356
      %v1358 = vrot.slane %v1326, %v1357
      %v1359 = vsel %vm662, %v1334, %v1330
      %v1360 = vsel %vm664, %v1338, %v1359
      %v1361 = vsel %vm666, %v1342, %v1360
      %v1362 = vsel %vm668, %v1346, %v1361
      %v1363 = vsel %vm670, %v1350, %v1362
      %v1364 = vsel %vm672, %v1354, %v1363
      %v1365 = vsel %vm674, %v1358, %v1364
      %v1366 = vpack.c.b16 %v1365, %v1365
      %v1368 = vunpack.c.l.b16 %v1298
      %v1369 = vunpack.c.h.b16 %v1298
      %v1370 = vpack.c.b16 %v1368, %v1368
      %v1371 = vpack.c.b16 %v1369, %v1369
      %v1373 = vsel %vm682, %v1366, 0
      %v1376 = vsel %vm686, %v1370, 0
      %v1379 = vsel %vm686, %v1371, 0
      %1381 = vmatprep.subr.bf16.mxu0 0
      %1382 = vmatpush1.bf16.msra.mxu0 0
      %1383 = vmatprep.subr.bf16.mxu0 0
      %1384 = vmatpush1.bf16.msra.mxu0 0
      %1385 = vmatprep.subr.bf16.mxu0 0
      %1386 = vmatpush1.bf16.msra.mxu0 0
      %1387 = vmatprep.subr.bf16.mxu0 0
      %1388 = vmatpush1.bf16.msra.mxu0 0
      %1389 = vmatprep.subr.bf16.mxu0 0
      %1390 = vmatpush1.bf16.msra.mxu0 0
      %1391 = vmatprep.subr.bf16.mxu0 0
      %1392 = vmatpush1.bf16.msra.mxu0 0
      %1393 = vmatprep.subr.bf16.mxu0 0
      %1394 = vmatpush1.bf16.msra.mxu0 0
      %1395 = vmatprep.subr.bf16.mxu0 %v1379
      %1396 = vmatpush1.bf16.msra.mxu0 %v1376
      %1397 = vmatprep.subr.bf16.mxu0 0
      %1398 = vmatpush2.bf16.msra.mxu0 0
      %1399 = vmatprep.subr.bf16.mxu0 0
      %1400 = vmatpush2.bf16.msra.mxu0 0
      %1401 = vmatprep.subr.bf16.mxu0 0
      %1402 = vmatpush2.bf16.msra.mxu0 0
      %1403 = vmatprep.subr.bf16.mxu0 0
      %1404 = vmatpush2.bf16.msra.mxu0 0
      %1405 = vmatprep.subr.bf16.mxu0 0
      %1406 = vmatpush2.bf16.msra.mxu0 0
      %1407 = vmatprep.subr.bf16.mxu0 0
      %1408 = vmatpush2.bf16.msra.mxu0 0
      %1409 = vmatprep.subr.bf16.mxu0 0
      %1410 = vmatpush2.bf16.msra.mxu0 0
      %1411 = vmatprep.subr.bf16.mxu0 0
      %1412 = vmatpush2.bf16.msra.mxu0 0
      %1413 = vmatprep.mubr.bf16.mxu0 0
      %1414 = vmatmul.mubr.bf16.gmra.mxu0 %v1373
      %v1415 = vpop.f32.mrf.mxu0
      %v1416 = vadd.f32 %v1304, %v1415
      %v1417 = vpop.f32.mrf.mxu0
      %v1418 = vadd.f32 %v1308, %v1417
      %v1419 = vpop.f32.mrf.mxu0
      %v1420 = vpop.f32.mrf.mxu0
      %1421 = vdwg.mxu0
      %v1422 = vmax.f32 %v1416, 0.0
      %v1423 = vmax.f32 %v1418, 0.0
      %v1424 = vpack.c.bf16 %v1422, %v1422
      %v1425 = vpack.c.bf16 %v1423, %v1423
      %v1426 = vld [vmem:[%s8] sm:$0xf]
      %v1427 = vld [vmem:[%s8 + $0x4] sm:$0xf]
      %v1428 = vld [vmem:[%s8 + $0x8] sm:$0xf]
      %v1429 = vld [vmem:[%s8 + $0xc] sm:$0xf]
      %v1430 = vld [vmem:[%s8 + $0x10] sm:$0xf]
      %v1431 = vld [vmem:[%s8 + $0x14] sm:$0xf]
      %v1432 = vld [vmem:[%s8 + $0x18] sm:$0xf]
      %v1433 = vld [vmem:[%s8 + $0x1c] sm:$0xf]
      %v1434 = vld [vmem:[%s8 + $0x20] sm:$0xf]
      %v1435 = vld [vmem:[%s8 + $0x24] sm:$0xf]
      %v1436 = vld [vmem:[%s8 + $0x28] sm:$0xf]
      %v1437 = vld [vmem:[%s8 + $0x2c] sm:$0xf]
      %v1438 = vld [vmem:[%s8 + $0x30] sm:$0xf]
      %v1439 = vld [vmem:[%s8 + $0x34] sm:$0xf]
      %v1440 = vld [vmem:[%s8 + $0x38] sm:$0xf]
      %v1441 = vld [vmem:[%s8 + $0x3c] sm:$0xf]
      %v1442 = vld [vmem:[%s8 + $0x40] sm:$0xf]
      %v1443 = vld [vmem:[%s8 + $0x44] sm:$0xf]
      %v1444 = vld [vmem:[%s8 + $0x48] sm:$0xf]
      %v1445 = vld [vmem:[%s8 + $0x4c] sm:$0xf]
      %v1446 = vld [vmem:[%s8 + $0x50] sm:$0xf]
      %v1447 = vld [vmem:[%s8 + $0x54] sm:$0xf]
      %v1448 = vld [vmem:[%s8 + $0x58] sm:$0xf]
      %v1449 = vld [vmem:[%s8 + $0x5c] sm:$0xf]
      %v1450 = vld [vmem:[%s8 + $0x60] sm:$0xf]
      %v1451 = vld [vmem:[%s8 + $0x64] sm:$0xf]
      %v1452 = vld [vmem:[%s8 + $0x68] sm:$0xf]
      %v1453 = vld [vmem:[%s8 + $0x6c] sm:$0xf]
      %v1454 = vld [vmem:[%s8 + $0x70] sm:$0xf]
      %v1455 = vld [vmem:[%s8 + $0x74] sm:$0xf]
      %v1456 = vld [vmem:[%s8 + $0x78] sm:$0xf]
      %v1457 = vld [vmem:[%s8 + $0x7c] sm:$0xf]
      %v1458 = vld [vmem:[%s9] sm:$0x1]
      %v1460 = vlaneseq
      %v1461 = vshrl.u32 %v1460, 7
      %v1462 = vsub.s32 0, %v1461
      %v1463 = vrot.slane %v1458, %v1462
      %v1497 = vunpack.c.l.b16 %v1426
      %v1498 = vunpack.c.l.b16 %v1427
      %v1499 = vunpack.c.l.b16 %v1428
      %v1500 = vunpack.c.l.b16 %v1429
      %v1501 = vunpack.c.l.b16 %v1430
      %v1502 = vunpack.c.l.b16 %v1431
      %v1503 = vunpack.c.l.b16 %v1432
      %v1504 = vunpack.c.l.b16 %v1433
      %v1505 = vunpack.c.l.b16 %v1434
      %v1506 = vunpack.c.l.b16 %v1435
      %v1507 = vunpack.c.l.b16 %v1436
      %v1508 = vunpack.c.l.b16 %v1437
      %v1509 = vunpack.c.l.b16 %v1438
      %v1510 = vunpack.c.l.b16 %v1439
      %v1511 = vunpack.c.l.b16 %v1440
      %v1512 = vunpack.c.l.b16 %v1441
      %v1513 = vunpack.c.l.b16 %v1442
      %v1514 = vunpack.c.l.b16 %v1443
      %v1515 = vunpack.c.l.b16 %v1444
      %v1516 = vunpack.c.l.b16 %v1445
      %v1517 = vunpack.c.l.b16 %v1446
      %v1518 = vunpack.c.l.b16 %v1447
      %v1519 = vunpack.c.l.b16 %v1448
      %v1520 = vunpack.c.l.b16 %v1449
      %v1521 = vunpack.c.l.b16 %v1450
      %v1522 = vunpack.c.l.b16 %v1451
      %v1523 = vunpack.c.l.b16 %v1452
      %v1524 = vunpack.c.l.b16 %v1453
      %v1525 = vunpack.c.l.b16 %v1454
      %v1526 = vunpack.c.l.b16 %v1455
      %v1527 = vunpack.c.l.b16 %v1456
      %v1528 = vunpack.c.l.b16 %v1457
      %v1529 = vpack.c.b16 %v1498, %v1497
      %v1530 = vpack.c.b16 %v1500, %v1499
      %v1531 = vpack.c.b16 %v1502, %v1501
      %v1532 = vpack.c.b16 %v1504, %v1503
      %v1533 = vpack.c.b16 %v1506, %v1505
      %v1534 = vpack.c.b16 %v1508, %v1507
      %v1535 = vpack.c.b16 %v1510, %v1509
      %v1536 = vpack.c.b16 %v1512, %v1511
      %v1537 = vpack.c.b16 %v1514, %v1513
      %v1538 = vpack.c.b16 %v1516, %v1515
      %v1539 = vpack.c.b16 %v1518, %v1517
      %v1540 = vpack.c.b16 %v1520, %v1519
      %v1541 = vpack.c.b16 %v1522, %v1521
      %v1542 = vpack.c.b16 %v1524, %v1523
      %v1543 = vpack.c.b16 %v1526, %v1525
      %v1544 = vpack.c.b16 %v1528, %v1527
      %1561 = vmatprep.subr.bf16.mxu0 0
      %1562 = vmatpush1.bf16.msra.mxu0 %v1536
      %1563 = vmatprep.subr.bf16.mxu0 0
      %1564 = vmatpush1.bf16.msra.mxu0 %v1535
      %1565 = vmatprep.subr.bf16.mxu0 0
      %1566 = vmatpush1.bf16.msra.mxu0 %v1534
      %1567 = vmatprep.subr.bf16.mxu0 0
      %1568 = vmatpush1.bf16.msra.mxu0 %v1533
      %1569 = vmatprep.subr.bf16.mxu0 0
      %1570 = vmatpush1.bf16.msra.mxu0 %v1532
      %1571 = vmatprep.subr.bf16.mxu0 0
      %1572 = vmatpush1.bf16.msra.mxu0 %v1531
      %1573 = vmatprep.subr.bf16.mxu0 0
      %1574 = vmatpush1.bf16.msra.mxu0 %v1530
      %1575 = vmatprep.subr.bf16.mxu0 0
      %1576 = vmatpush1.bf16.msra.mxu0 %v1529
      %1577 = vmatprep.subr.bf16.mxu0 0
      %1578 = vmatpush2.bf16.msra.mxu0 %v1544
      %1579 = vmatprep.subr.bf16.mxu0 0
      %1580 = vmatpush2.bf16.msra.mxu0 %v1543
      %1581 = vmatprep.subr.bf16.mxu0 0
      %1582 = vmatpush2.bf16.msra.mxu0 %v1542
      %1583 = vmatprep.subr.bf16.mxu0 0
      %1584 = vmatpush2.bf16.msra.mxu0 %v1541
      %1585 = vmatprep.subr.bf16.mxu0 0
      %1586 = vmatpush2.bf16.msra.mxu0 %v1540
      %1587 = vmatprep.subr.bf16.mxu0 0
      %1588 = vmatpush2.bf16.msra.mxu0 %v1539
      %1589 = vmatprep.subr.bf16.mxu0 0
      %1590 = vmatpush2.bf16.msra.mxu0 %v1538
      %1591 = vmatprep.subr.bf16.mxu0 0
      %1592 = vmatpush2.bf16.msra.mxu0 %v1537
      %1593 = vmatprep.mubr.bf16.mxu0 %v1425
      %1594 = vmatmul.mubr.bf16.gmra.mxu0 %v1424
      %v1595 = vpop.f32.mrf.mxu0
      %v1596 = vadd.f32 %v1463, %v1595
      %v1597 = vpop.f32.mrf.mxu0
      %v1598 = vpop.f32.mrf.mxu0
      %v1599 = vpop.f32.mrf.mxu0
      %1600 = vdwg.mxu0
      %v1601 = vmul.f32 %v1285, %v1285
      %1602 = vadd.xlane.f32.xlu0 %v1601
      %v1603 = vpop.xlane.xlu0 %1602
      %v1604 = vmax.f32 %v1603, 1e-24
      %v1605 = vrsqrt.pop %v1604
      %v1606 = vmul.f32 %v1285, %v1605
      %v1607 = vmul.f32 %v1596, %v1596
      %1608 = vadd.xlane.f32.xlu0 %v1607
      %v1609 = vpop.xlane.xlu0 %1608
      %v1610 = vmax.f32 %v1609, 1e-24
      %v1611 = vrsqrt.pop %v1610
      %v1612 = vmul.f32 %v1596, %v1611
      %1613 = vmatprep.subr.mxu0 0.0
      %1614 = vmatpush1.xpose.msra.mxu0 0.0
      %1615 = vmatprep.subr.mxu0 0.0
      %1616 = vmatpush1.xpose.msra.mxu0 0.0
      %1617 = vmatprep.subr.mxu0 0.0
      %1618 = vmatpush1.xpose.msra.mxu0 0.0
      %1619 = vmatprep.subr.mxu0 0.0
      %1620 = vmatpush1.xpose.msra.mxu0 0.0
      %1621 = vmatprep.subr.mxu0 0.0
      %1622 = vmatpush1.xpose.msra.mxu0 0.0
      %1623 = vmatprep.subr.mxu0 0.0
      %1624 = vmatpush1.xpose.msra.mxu0 0.0
      %1625 = vmatprep.subr.mxu0 0.0
      %1626 = vmatpush1.xpose.msra.mxu0 0.0
      %1627 = vmatprep.subr.mxu0 0.0
      %1628 = vmatpush1.xpose.msra.mxu0 0.0
      %1629 = vmatprep.subr.mxu0 0.0
      %1630 = vmatpush1.xpose.msra.mxu0 0.0
      %1631 = vmatprep.subr.mxu0 0.0
      %1632 = vmatpush1.xpose.msra.mxu0 0.0
      %1633 = vmatprep.subr.mxu0 0.0
      %1634 = vmatpush1.xpose.msra.mxu0 0.0
      %1635 = vmatprep.subr.mxu0 0.0
      %1636 = vmatpush1.xpose.msra.mxu0 0.0
      %1637 = vmatprep.subr.mxu0 0.0
      %1638 = vmatpush1.xpose.msra.mxu0 0.0
      %1639 = vmatprep.subr.mxu0 0.0
      %1640 = vmatpush1.xpose.msra.mxu0 0.0
      %1641 = vmatprep.subr.mxu0 0.0
      %1642 = vmatpush1.xpose.msra.mxu0 0.0
      %1643 = vmatprep.subr.mxu0 0.0
      %1644 = vmatpush1.xpose.msra.mxu0 %v1612
      %1645 = vmatprep.subr.mxu0 0.0
      %1646 = vmatpush2.xpose.msra.mxu0 0.0
      %1647 = vmatprep.subr.mxu0 0.0
      %1648 = vmatpush2.xpose.msra.mxu0 0.0
      %1649 = vmatprep.subr.mxu0 0.0
      %1650 = vmatpush2.xpose.msra.mxu0 0.0
      %1651 = vmatprep.subr.mxu0 0.0
      %1652 = vmatpush2.xpose.msra.mxu0 0.0
      %1653 = vmatprep.subr.mxu0 0.0
      %1654 = vmatpush2.xpose.msra.mxu0 0.0
      %1655 = vmatprep.subr.mxu0 0.0
      %1656 = vmatpush2.xpose.msra.mxu0 0.0
      %1657 = vmatprep.subr.mxu0 0.0
      %1658 = vmatpush2.xpose.msra.mxu0 0.0
      %1659 = vmatprep.subr.mxu0 0.0
      %1660 = vmatpush2.xpose.msra.mxu0 0.0
      %1661 = vmatprep.subr.mxu0 0.0
      %1662 = vmatpush2.xpose.msra.mxu0 0.0
      %1663 = vmatprep.subr.mxu0 0.0
      %1664 = vmatpush2.xpose.msra.mxu0 0.0
      %1665 = vmatprep.subr.mxu0 0.0
      %1666 = vmatpush2.xpose.msra.mxu0 0.0
      %1667 = vmatprep.subr.mxu0 0.0
      %1668 = vmatpush2.xpose.msra.mxu0 0.0
      %1669 = vmatprep.subr.mxu0 0.0
      %1670 = vmatpush2.xpose.msra.mxu0 0.0
      %1671 = vmatprep.subr.mxu0 0.0
      %1672 = vmatpush2.xpose.msra.mxu0 0.0
      %1673 = vmatprep.subr.mxu0 0.0
      %1674 = vmatpush2.xpose.msra.mxu0 0.0
      %1675 = vmatprep.subr.mxu0 0.0
      %1676 = vmatpush2.xpose.msra.mxu0 0.0
      %1677 = vmatprep.mubr.f32.mxu0 0.0
      %1678 = vmatmul.mubr.f32.gmra.mxu0 %v1606
      %v1679 = vpop.f32.mrf.mxu0
      %v1680 = vadd.f32 0.0, %v1679
      %v1681 = vpop.f32.mrf.mxu0
      %1682 = vdwg.mxu0
      %v1683 = vmul.f32 %v1606, %v1612
      %1684 = vadd.xlane.f32.xlu0 %v1683
      %v1685 = vpop.xlane.xlu0 %1684
      %v1686 = vsel %vm682, %v1680, -inf
      %1687 = vmax.xlane.f32.xlu0 %v1686
      %v1688 = vpop.xlane.xlu0 %1687
      %v1689 = vsub.f32 %v1680, %v1688
      %v1690 = vmul.f32 %v1689, 1.442695
      %v1691 = vpow.pop %v1690
      %v1692 = vsel %vm682, %v1691, 0.0
      %1693 = vadd.xlane.f32.xlu0 %v1692
      %v1694 = vpop.xlane.xlu0 %1693
      %v1695 = vlog2.pop %v1694
      %v1696 = vmul.f32 %v1695, 0.6931472
      %v1697 = vadd.f32 %v1696, %v1688
      %v1698 = vsub.f32 %v1697, %v1685
      %vm1699 = vcmask 7168
      %v1700 = vsel %vm1699, %v1698, 0.0
      %1701 = vadd.xlane.f32.xlu0 %v1700
      %v1702 = vpop.xlane.xlu0 %1701
      %v1703 = vrot.slane %v1702, 4
      %v1704 = vadd.f32 %v1702, %v1703
      %v1705 = vrot.slane %v1704, 2
      %v1706 = vadd.f32 %v1704, %v1705
      %v1707 = vrot.slane %v1706, 1
      %v1708 = vadd.f32 %v1706, %v1707
      %s1709 = vtos %v1708
      %v1710 = vrcp.pop 8.0
      %s1711 = vtos %v1710
      %s1712 = smul.f32 %s1709, %s1711
      %s1713 = smul.f32 %s1712, 2.0
      %v1714 = vstv %s1713
      %1715 = vst [vmem:[%s492] sm:$0xff] %v1714
      %p1716 = scmp.lt.s32.totalorder %s25, 1
      %s1717 = scalar_select %p1716, %s25, 1
      %s1718 = smul.addr %s1717, 8
      %s1719 = scalar_lea.vmem %s14, %s1718
      // Predicated region
      $region77: #{moco_forward.3} parent=75 // pred_check
        %p1720 = pneg %p349
      $region78: #{moco_forward.3} parent=75 // pred_check_branch
        %1722 = sbr.rel (%p1720) target = $region80
      $region79: #{moco_forward.3} parent=75 // pred_region
        _
      $region80: #{moco_forward.3} parent=75 // pred_fallthru
        _
    $region76: #{moco_forward.3} parent=5 // pred_fallthru
      _
    %p1723 = scmp.le.s32.totalorder 2, %s20
    // Predicated region
    $region81: #{moco_forward.3} parent=5 // pred_check
      %p1724 = pneg %p1723
    $region82: #{moco_forward.3} parent=5 // pred_check_branch
      %1726 = sbr.rel (%p1724) target = $region84
    $region83: #{moco_forward.3} parent=5 // pred_region
      %s1727 = ssub.s32 %s20, 2
      // Predicated region
      $region85: #{moco_forward.3} parent=83 // pred_check
        %p1728 = pneg %p355
      $region86: #{moco_forward.3} parent=83 // pred_check_branch
        %1730 = sbr.rel (%p1728) target = $region88
      $region87: #{moco_forward.3} parent=83 // pred_region
        %p1731 = scmp.lt.s32.totalorder %s26, 1
        %s1732 = scalar_select %p1731, %s26, 1
        %s1733 = smul.addr %s1732, 8
        %s1734 = scalar_lea.vmem %s14, %s1733
      $region88: #{moco_forward.3} parent=83 // pred_fallthru
        _
    $region84: #{moco_forward.3} parent=5 // pred_fallthru
      _
  $region6: #{moco_forward.3} parent=0 // loop_footer
    %s24 = sadd.s32 1, %s20
  $region7: #{moco_forward.3} parent=0 // loop_footer_branch
    %19 = sbr.rel target = $region3
  $region8: #{moco_forward.3} parent=0 // loop_exit
    _

</llo_original>
